<compile_context>
chip_gen: v7x
topology: tpu7x:2x2x1
jax: 0.10.0
libtpu: 0.0.40
codegen_flags: <defaults>
</compile_context>

<pallas_src>
import jax
import jax.numpy as jnp
from jax.experimental import pallas as pl
from jax.experimental.pallas import tpu as pltpu

IN_DIM, H1_DIM, H2_DIM, OUT_DIM = 131, 64, 32, 1
LANE = 128


def _round_up(n, m):
    return ((n + m - 1) // m) * m


def _make_kernel(dense_out):
    def kernel(x_ref, w1_ref, b1_ref, w2_ref, b2_ref, w3_ref, b3_ref, o_ref):
        # Per-tile bf16 cast (instead of a separate full-array XLA convert in HBM).
        xb = x_ref[...].astype(jnp.bfloat16)                                # [tb, 131]
        # Layer 1: bf16 MXU matmul, f32 accumulation; bias/ReLU in f32 on the VPU.
        # (On v5e K=131 costs 2 MXU K-passes; inherent, not worth restructuring.)
        h1 = jnp.dot(xb, w1_ref[...], preferred_element_type=jnp.float32)   # [tb, 64]
        h1 = jnp.maximum(h1 + b1_ref[...], 0.0)
        # Layer 2: cast only at the dot boundary, keep elementwise f32.
        h2 = jnp.dot(h1.astype(jnp.bfloat16), w2_ref[...],
                     preferred_element_type=jnp.float32)                    # [tb, 32]
        h2 = jnp.maximum(h2 + b2_ref[...], 0.0)
        # Layer 3 (out width 1): broadcast-multiply on the VPU + lane reduce on the XLU
        # instead of wasting an MXU pass for a 1-lane-wide result.
        z = jnp.sum(h2 * w3_ref[...], axis=-1, keepdims=True)               # [tb, 1] f32
        if dense_out:
            # Lane-dense relayout: [tb, 1] -> [tb//128, 128] so the bias add, sigmoid
            # (EUP) and the store all run on dense vregs and the writeback is unmasked.
            z = z.reshape(z.shape[0] // LANE, LANE)
        o_ref[...] = jax.nn.sigmoid(z + b3_ref[...])
    return kernel


def _pick_tile(batch, tb):
    """Batch tile: multiple of 128, large enough to amortize per-step overhead,
    small enough that the honest VMEM estimate stays under the v7x-safe cap."""
    tb = max(LANE, min(int(tb), 4096))          # raise 4096 on v5e/v6e (128 MiB VMEM)
    tb = _round_up(tb, LANE)
    b_ceil = _round_up(batch, LANE)
    if b_ceil <= tb:
        return b_ceil                            # single tile covering the padded batch
    return _round_up(tb, 8 * LANE)               # multi-tile: tb//128 multiple of 8


def _vmem_limit_bytes(tb, dense_out):
    """Honest VMEM accounting: lane padding (131->256), f32 intermediates, double
    buffers. Capped at 40 MiB so it is safe on v7x (64 MiB total)."""
    in_l = _round_up(IN_DIM, LANE)   # 256
    h1_l = _round_up(H1_DIM, LANE)   # 128
    h2_l = _round_up(H2_DIM, LANE)   # 128
    x_in = 2 * tb * in_l * 4                                   # double-buffered f32 x
    if dense_out:
        out_b = 2 * _round_up(tb // LANE, 8) * LANE * 4        # dense output slab
    else:
        out_b = 2 * _round_up(tb, 8) * LANE * 4                # (tb,1) lane-padded
    interm = (tb * in_l * 2                                    # bf16 copy of x
              + tb * h1_l * (4 + 2)                            # h1 f32 + bf16
              + tb * h2_l * (4 + 4))                           # h2 f32 + h2*w3 product
    params = 2 * ((IN_DIM * H1_DIM + H1_DIM * H2_DIM) * 2
                  + (H1_DIM + 2 * H2_DIM + 1) * 4)
    est = x_in + out_b + interm + params + (1 << 20)
    return int(min(max(int(1.4 * est), 16 << 20), 40 << 20))


def _net1_pallas(x, w1b, b1f, w2b, b2f, w3f, b3f, *, tb, dense_out):
    batch = x.shape[0]
    grid = (pl.cdiv(batch, tb),)

    def const_spec(arr):
        # Small parameter arrays: whole-array block, same block every grid step
        # (stays VMEM-resident, no re-DMA per tile).
        return pl.BlockSpec(arr.shape, lambda i, _nd=arr.ndim: (0,) * _nd)

    in_specs = [
        pl.BlockSpec((tb, IN_DIM), lambda i: (i, 0)),   # x: tiled over batch (ragged ok)
        const_spec(w1b), const_spec(b1f),
        const_spec(w2b), const_spec(b2f),
        const_spec(w3f), const_spec(b3f),
    ]

    if dense_out:
        out_shape = jax.ShapeDtypeStruct((pl.cdiv(batch, LANE), LANE), jnp.float32)
        out_specs = pl.BlockSpec((tb // LANE, LANE), lambda i: (i, 0))
    else:
        out_shape = jax.ShapeDtypeStruct((batch, OUT_DIM), jnp.float32)
        out_specs = pl.BlockSpec((tb, OUT_DIM), lambda i: (i, 0))

    param_bytes = (IN_DIM * H1_DIM + H1_DIM * H2_DIM) * 2 + (H1_DIM + 2 * H2_DIM + 1) * 4
    flops = 2 * batch * (IN_DIM * H1_DIM + H1_DIM * H2_DIM + H2_DIM * OUT_DIM)
    bytes_accessed = batch * (IN_DIM * 4 + OUT_DIM * 4) + param_bytes

    out = pl.pallas_call(
        _make_kernel(dense_out),
        out_shape=out_shape,
        grid=grid,
        in_specs=in_specs,
        out_specs=out_specs,
        compiler_params=pltpu.CompilerParams(
            dimension_semantics=("parallel",),          # shard batch tiles across TCs
            vmem_limit_bytes=_vmem_limit_bytes(tb, dense_out),
        ),
        cost_estimate=pl.CostEstimate(
            flops=flops, transcendentals=batch, bytes_accessed=bytes_accessed),
    )(x, w1b, b1f, w2b, b2f, w3f, b3f)

    if dense_out:
        # (ceil(B/128), 128) -> (ceil(B/128)*128, 1) is a free row-major reshape; the
        # slice drops the <=127 garbage tail rows that were never real batch rows.
        out = out.reshape(-1, OUT_DIM)[:batch]
    return out


_DENSE_OUT_OK = True   # flips to False once if the lane-dense relayout fails to lower


def net1_forward(x, params, *, tb=4096):
    """x: [B, 131] float32. params: w1,b1,w2,b2,w3,b3 (weights [in,out], biases [1,out]).

    Note: matmul operands are bf16 (f32 accumulation, f32 elementwise) -- inference-grade
    precision; use an f32 path if bit-closeness to the f32 PyTorch reference matters."""
    global _DENSE_OUT_OK
    batch, f_in = x.shape
    assert f_in == IN_DIM

    # Tiny parameter arrays: casting them is negligible; x is NOT touched in the wrapper.
    w1b = params["w1"].astype(jnp.bfloat16)                     # [131, 64]
    b1f = params["b1"].astype(jnp.float32)                      # [1, 64]
    w2b = params["w2"].astype(jnp.bfloat16)                     # [64, 32]
    b2f = params["b2"].astype(jnp.float32)                      # [1, 32]
    w3f = params["w3"].astype(jnp.float32).reshape(1, H2_DIM)   # [1, 32] (row vector)
    b3f = params["b3"].astype(jnp.float32).reshape(1, 1)        # [1, 1]

    tile = _pick_tile(batch, tb)

    if _DENSE_OUT_OK:
        try:
            return _net1_pallas(x, w1b, b1f, w2b, b2f, w3f, b3f,
                                tb=tile, dense_out=True)
        except Exception:
            _DENSE_OUT_OK = False   # relayout unsupported on this toolchain; fall back
    return _net1_pallas(x, w1b, b1f, w2b, b2f, w3f, b3f, tb=tile, dense_out=False)


def init_params(key):
    """Deterministic init matching PyTorch nn.Linear default: U(-1/sqrt(fan_in), +)."""
    dims = [(IN_DIM, H1_DIM), (H1_DIM, H2_DIM), (H2_DIM, OUT_DIM)]
    params = {}
    for i, (fan_in, fan_out) in enumerate(dims, start=1):
        key, kw, kb = jax.random.split(key, 3)
        bound = 1.0 / (fan_in ** 0.5)
        params[f"w{i}"] = jax.random.uniform(
            kw, (fan_in, fan_out), minval=-bound, maxval=bound, dtype=jnp.float32)
        params[f"b{i}"] = jax.random.uniform(
            kb, (1, fan_out), minval=-bound, maxval=bound, dtype=jnp.float32)
    return params


def net1_reference(x, params):
    h1 = jax.nn.relu(x @ params["w1"] + params["b1"])
    h2 = jax.nn.relu(h1 @ params["w2"] + params["b2"])
    return jax.nn.sigmoid(h2 @ params["w3"] + params["b3"])


if __name__ == "__main__":
    key = jax.random.PRNGKey(0)
    key, kx1, kx2 = jax.random.split(key, 3)
    params = init_params(key)

    # 131 inputs: 8x8 is_black, 8x8 is_white, last_pass, current_black, current_white.
    # Case 1: small batch -> single ragged tile (B < 128), masked edge read/write.
    B1 = 8
    x1 = jax.random.uniform(kx1, (B1, IN_DIM), dtype=jnp.float32)
    out1 = jax.block_until_ready(net1_forward(x1, params))
    ref1 = net1_reference(x1, params)
    assert out1.shape == (B1, 1)
    assert bool(jnp.allclose(out1, ref1, atol=2e-2, rtol=2e-2)), "mismatch (case 1)"

    # Case 2: multi-step grid with a ragged last block (no wrapper pad), tb forced small.
    B2 = 1300
    x2 = jax.random.uniform(kx2, (B2, IN_DIM), dtype=jnp.float32)
    out2 = jax.block_until_ready(net1_forward(x2, params, tb=1024))
    ref2 = net1_reference(x2, params)
    assert out2.shape == (B2, 1)
    assert bool(jnp.allclose(out2, ref2, atol=2e-2, rtol=2e-2)), "mismatch (case 2)"

    print("KERNEL_OK")
</pallas_src>

<mosaic_0001>
module attributes {stable_mosaic.version = 11 : i64} {
  func.func @kernel(%arg0: i32, %arg1: memref<128x131xf32, #tpu.memory_space<vmem>>, %arg2: memref<131x64xbf16, #tpu.memory_space<vmem>>, %arg3: memref<1x64xf32, #tpu.memory_space<vmem>>, %arg4: memref<64x32xbf16, #tpu.memory_space<vmem>>, %arg5: memref<1x32xf32, #tpu.memory_space<vmem>>, %arg6: memref<1x32xf32, #tpu.memory_space<vmem>>, %arg7: memref<1x1xf32, #tpu.memory_space<vmem>>, %arg8: memref<1x128xf32, #tpu.memory_space<vmem>>) attributes {dimension_semantics = [#tpu.dimension_semantics<parallel>], iteration_bounds = array<i64: 1>, scalar_prefetch = 0 : i64, scratch_operands = 0 : i64, tpu.core_type = #tpu.core_type<tc>, window_params = [{transform_indices = @transform_0, window_bounds = array<i64: 128, 131>}, {pipeline_mode = #tpu.pipeline_mode<synchronous>, transform_indices = @transform_1, window_bounds = array<i64: 131, 64>}, {pipeline_mode = #tpu.pipeline_mode<synchronous>, transform_indices = @transform_2, window_bounds = array<i64: 1, 64>}, {pipeline_mode = #tpu.pipeline_mode<synchronous>, transform_indices = @transform_3, window_bounds = array<i64: 64, 32>}, {pipeline_mode = #tpu.pipeline_mode<synchronous>, transform_indices = @transform_4, window_bounds = array<i64: 1, 32>}, {pipeline_mode = #tpu.pipeline_mode<synchronous>, transform_indices = @transform_5, window_bounds = array<i64: 1, 32>}, {pipeline_mode = #tpu.pipeline_mode<synchronous>, transform_indices = @transform_6, window_bounds = array<i64: 1, 1>}, {transform_indices = @transform_7, window_bounds = array<i64: 1, 128>}]} {
    %c0 = arith.constant 0 : index
    %c0_0 = arith.constant 0 : index
    %0 = vector.load %arg1[%c0, %c0_0] : memref<128x131xf32, #tpu.memory_space<vmem>>, vector<128x131xf32>
    %1 = arith.truncf %0 : vector<128x131xf32> to vector<128x131xbf16>
    %c0_1 = arith.constant 0 : index
    %c0_2 = arith.constant 0 : index
    %2 = vector.load %arg2[%c0_1, %c0_2] : memref<131x64xbf16, #tpu.memory_space<vmem>>, vector<131x64xbf16>
    %cst = arith.constant dense<0.000000e+00> : vector<128x64xf32>
    %3 = tpu.matmul %1, %2, %cst {dimension_numbers = #tpu.dot_dimension_numbers<[1], [0], [0], [1], [0, 0, 1, 1], [], []>} : vector<128x131xbf16>, vector<131x64xbf16>, vector<128x64xf32> -> vector<128x64xf32>
    %c0_3 = arith.constant 0 : index
    %c0_4 = arith.constant 0 : index
    %4 = vector.load %arg3[%c0_3, %c0_4] : memref<1x64xf32, #tpu.memory_space<vmem>>, vector<1x64xf32>
    %5 = vector.broadcast %4 : vector<1x64xf32> to vector<128x64xf32>
    %6 = arith.addf %3, %5 : vector<128x64xf32>
    %cst_5 = arith.constant 0.000000e+00 : f32
    %7 = vector.broadcast %cst_5 : f32 to vector<128x64xf32>
    %8 = arith.maximumf %6, %7 : vector<128x64xf32>
    %9 = arith.truncf %8 : vector<128x64xf32> to vector<128x64xbf16>
    %c0_6 = arith.constant 0 : index
    %c0_7 = arith.constant 0 : index
    %10 = vector.load %arg4[%c0_6, %c0_7] : memref<64x32xbf16, #tpu.memory_space<vmem>>, vector<64x32xbf16>
    %cst_8 = arith.constant dense<0.000000e+00> : vector<128x32xf32>
    %11 = tpu.matmul %9, %10, %cst_8 {dimension_numbers = #tpu.dot_dimension_numbers<[1], [0], [0], [1], [0, 0, 1, 1], [], []>} : vector<128x64xbf16>, vector<64x32xbf16>, vector<128x32xf32> -> vector<128x32xf32>
    %c0_9 = arith.constant 0 : index
    %c0_10 = arith.constant 0 : index
    %12 = vector.load %arg5[%c0_9, %c0_10] : memref<1x32xf32, #tpu.memory_space<vmem>>, vector<1x32xf32>
    %13 = vector.broadcast %12 : vector<1x32xf32> to vector<128x32xf32>
    %14 = arith.addf %11, %13 : vector<128x32xf32>
    %cst_11 = arith.constant 0.000000e+00 : f32
    %15 = vector.broadcast %cst_11 : f32 to vector<128x32xf32>
    %16 = arith.maximumf %14, %15 : vector<128x32xf32>
    %c0_12 = arith.constant 0 : index
    %c0_13 = arith.constant 0 : index
    %17 = vector.load %arg6[%c0_12, %c0_13] : memref<1x32xf32, #tpu.memory_space<vmem>>, vector<1x32xf32>
    %18 = vector.broadcast %17 : vector<1x32xf32> to vector<128x32xf32>
    %19 = arith.mulf %16, %18 : vector<128x32xf32>
    %cst_14 = arith.constant dense<0.000000e+00> : vector<128xf32>
    %20 = vector.multi_reduction <add>, %19, %cst_14 [1] : vector<128x32xf32> to vector<128xf32>
    %21 = vector.shape_cast %20 : vector<128xf32> to vector<128x1xf32>
    %22 = vector.shape_cast %21 : vector<128x1xf32> to vector<1x128xf32>
    %c0_15 = arith.constant 0 : index
    %c0_16 = arith.constant 0 : index
    %23 = vector.load %arg7[%c0_15, %c0_16] : memref<1x1xf32, #tpu.memory_space<vmem>>, vector<1x1xf32>
    %24 = vector.broadcast %23 : vector<1x1xf32> to vector<1x128xf32>
    %25 = arith.addf %22, %24 : vector<1x128xf32>
    %26 = arith.negf %25 : vector<1x128xf32>
    %27 = math.exp %26 : vector<1x128xf32>
    %cst_17 = arith.constant 1.000000e+00 : f32
    %28 = vector.broadcast %cst_17 : f32 to vector<1x128xf32>
    %29 = arith.addf %28, %27 : vector<1x128xf32>
    %30 = arith.divf %28, %29 : vector<1x128xf32>
    %c0_18 = arith.constant 0 : index
    %c0_19 = arith.constant 0 : index
    %31 = vector.load %arg8[%c0_18, %c0_19] : memref<1x128xf32, #tpu.memory_space<vmem>>, vector<1x128xf32>
    tpu.vector_store %arg8[%c0_18, %c0_19], %30 {strides = array<i32>} : memref<1x128xf32, #tpu.memory_space<vmem>>, vector<1x128xf32>,
    return
  }
  func.func @transform_0(%arg0: i32) -> (i32, i32) {
    %c0_i32 = arith.constant 0 : i32
    %c0_i32_0 = arith.constant 0 : i32
    return %arg0, %c0_i32 : i32, i32
  }
  func.func @transform_1(%arg0: i32) -> (i32, i32) {
    %c0_i32 = arith.constant 0 : i32
    %c0_i32_0 = arith.constant 0 : i32
    %c0_i32_1 = arith.constant 0 : i32
    return %c0_i32, %c0_i32_0 : i32, i32
  }
  func.func @transform_2(%arg0: i32) -> (i32, i32) {
    %c0_i32 = arith.constant 0 : i32
    %c0_i32_0 = arith.constant 0 : i32
    %c0_i32_1 = arith.constant 0 : i32
    return %c0_i32, %c0_i32_0 : i32, i32
  }
  func.func @transform_3(%arg0: i32) -> (i32, i32) {
    %c0_i32 = arith.constant 0 : i32
    %c0_i32_0 = arith.constant 0 : i32
    %c0_i32_1 = arith.constant 0 : i32
    return %c0_i32, %c0_i32_0 : i32, i32
  }
  func.func @transform_4(%arg0: i32) -> (i32, i32) {
    %c0_i32 = arith.constant 0 : i32
    %c0_i32_0 = arith.constant 0 : i32
    %c0_i32_1 = arith.constant 0 : i32
    return %c0_i32, %c0_i32_0 : i32, i32
  }
  func.func @transform_5(%arg0: i32) -> (i32, i32) {
    %c0_i32 = arith.constant 0 : i32
    %c0_i32_0 = arith.constant 0 : i32
    %c0_i32_1 = arith.constant 0 : i32
    return %c0_i32, %c0_i32_0 : i32, i32
  }
  func.func @transform_6(%arg0: i32) -> (i32, i32) {
    %c0_i32 = arith.constant 0 : i32
    %c0_i32_0 = arith.constant 0 : i32
    %c0_i32_1 = arith.constant 0 : i32
    return %c0_i32, %c0_i32_0 : i32, i32
  }
  func.func @transform_7(%arg0: i32) -> (i32, i32) {
    %c0_i32 = arith.constant 0 : i32
    %c0_i32_0 = arith.constant 0 : i32
    return %arg0, %c0_i32 : i32, i32
  }
}

module attributes {stable_mosaic.version = 11 : i64} {
  func.func @kernel(%arg0: i32, %arg1: memref<128x131xf32, #tpu.memory_space<vmem>>, %arg2: memref<131x64xbf16, #tpu.memory_space<vmem>>, %arg3: memref<1x64xf32, #tpu.memory_space<vmem>>, %arg4: memref<64x32xbf16, #tpu.memory_space<vmem>>, %arg5: memref<1x32xf32, #tpu.memory_space<vmem>>, %arg6: memref<1x32xf32, #tpu.memory_space<vmem>>, %arg7: memref<1x1xf32, #tpu.memory_space<vmem>>, %arg8: memref<128x1xf32, #tpu.memory_space<vmem>>) attributes {dimension_semantics = [#tpu.dimension_semantics<parallel>], iteration_bounds = array<i64: 1>, scalar_prefetch = 0 : i64, scratch_operands = 0 : i64, tpu.core_type = #tpu.core_type<tc>, window_params = [{transform_indices = @transform_0, window_bounds = array<i64: 128, 131>}, {pipeline_mode = #tpu.pipeline_mode<synchronous>, transform_indices = @transform_1, window_bounds = array<i64: 131, 64>}, {pipeline_mode = #tpu.pipeline_mode<synchronous>, transform_indices = @transform_2, window_bounds = array<i64: 1, 64>}, {pipeline_mode = #tpu.pipeline_mode<synchronous>, transform_indices = @transform_3, window_bounds = array<i64: 64, 32>}, {pipeline_mode = #tpu.pipeline_mode<synchronous>, transform_indices = @transform_4, window_bounds = array<i64: 1, 32>}, {pipeline_mode = #tpu.pipeline_mode<synchronous>, transform_indices = @transform_5, window_bounds = array<i64: 1, 32>}, {pipeline_mode = #tpu.pipeline_mode<synchronous>, transform_indices = @transform_6, window_bounds = array<i64: 1, 1>}, {transform_indices = @transform_7, window_bounds = array<i64: 128, 1>}]} {
    %c0 = arith.constant 0 : index
    %c0_0 = arith.constant 0 : index
    %0 = vector.load %arg1[%c0, %c0_0] : memref<128x131xf32, #tpu.memory_space<vmem>>, vector<128x131xf32>
    %1 = arith.truncf %0 : vector<128x131xf32> to vector<128x131xbf16>
    %c0_1 = arith.constant 0 : index
    %c0_2 = arith.constant 0 : index
    %2 = vector.load %arg2[%c0_1, %c0_2] : memref<131x64xbf16, #tpu.memory_space<vmem>>, vector<131x64xbf16>
    %cst = arith.constant dense<0.000000e+00> : vector<128x64xf32>
    %3 = tpu.matmul %1, %2, %cst {dimension_numbers = #tpu.dot_dimension_numbers<[1], [0], [0], [1], [0, 0, 1, 1], [], []>} : vector<128x131xbf16>, vector<131x64xbf16>, vector<128x64xf32> -> vector<128x64xf32>
    %c0_3 = arith.constant 0 : index
    %c0_4 = arith.constant 0 : index
    %4 = vector.load %arg3[%c0_3, %c0_4] : memref<1x64xf32, #tpu.memory_space<vmem>>, vector<1x64xf32>
    %5 = vector.broadcast %4 : vector<1x64xf32> to vector<128x64xf32>
    %6 = arith.addf %3, %5 : vector<128x64xf32>
    %cst_5 = arith.constant 0.000000e+00 : f32
    %7 = vector.broadcast %cst_5 : f32 to vector<128x64xf32>
    %8 = arith.maximumf %6, %7 : vector<128x64xf32>
    %9 = arith.truncf %8 : vector<128x64xf32> to vector<128x64xbf16>
    %c0_6 = arith.constant 0 : index
    %c0_7 = arith.constant 0 : index
    %10 = vector.load %arg4[%c0_6, %c0_7] : memref<64x32xbf16, #tpu.memory_space<vmem>>, vector<64x32xbf16>
    %cst_8 = arith.constant dense<0.000000e+00> : vector<128x32xf32>
    %11 = tpu.matmul %9, %10, %cst_8 {dimension_numbers = #tpu.dot_dimension_numbers<[1], [0], [0], [1], [0, 0, 1, 1], [], []>} : vector<128x64xbf16>, vector<64x32xbf16>, vector<128x32xf32> -> vector<128x32xf32>
    %c0_9 = arith.constant 0 : index
    %c0_10 = arith.constant 0 : index
    %12 = vector.load %arg5[%c0_9, %c0_10] : memref<1x32xf32, #tpu.memory_space<vmem>>, vector<1x32xf32>
    %13 = vector.broadcast %12 : vector<1x32xf32> to vector<128x32xf32>
    %14 = arith.addf %11, %13 : vector<128x32xf32>
    %cst_11 = arith.constant 0.000000e+00 : f32
    %15 = vector.broadcast %cst_11 : f32 to vector<128x32xf32>
    %16 = arith.maximumf %14, %15 : vector<128x32xf32>
    %c0_12 = arith.constant 0 : index
    %c0_13 = arith.constant 0 : index
    %17 = vector.load %arg6[%c0_12, %c0_13] : memref<1x32xf32, #tpu.memory_space<vmem>>, vector<1x32xf32>
    %18 = vector.broadcast %17 : vector<1x32xf32> to vector<128x32xf32>
    %19 = arith.mulf %16, %18 : vector<128x32xf32>
    %cst_14 = arith.constant dense<0.000000e+00> : vector<128xf32>
    %20 = vector.multi_reduction <add>, %19, %cst_14 [1] : vector<128x32xf32> to vector<128xf32>
    %21 = vector.shape_cast %20 : vector<128xf32> to vector<128x1xf32>
    %c0_15 = arith.constant 0 : index
    %c0_16 = arith.constant 0 : index
    %22 = vector.load %arg7[%c0_15, %c0_16] : memref<1x1xf32, #tpu.memory_space<vmem>>, vector<1x1xf32>
    %23 = vector.broadcast %22 : vector<1x1xf32> to vector<128x1xf32>
    %24 = arith.addf %21, %23 : vector<128x1xf32>
    %25 = arith.negf %24 : vector<128x1xf32>
    %26 = math.exp %25 : vector<128x1xf32>
    %cst_17 = arith.constant 1.000000e+00 : f32
    %27 = vector.broadcast %cst_17 : f32 to vector<128x1xf32>
    %28 = arith.addf %27, %26 : vector<128x1xf32>
    %29 = arith.divf %27, %28 : vector<128x1xf32>
    %c0_18 = arith.constant 0 : index
    %c0_19 = arith.constant 0 : index
    %30 = vector.load %arg8[%c0_18, %c0_19] : memref<128x1xf32, #tpu.memory_space<vmem>>, vector<128x1xf32>
    tpu.vector_store %arg8[%c0_18, %c0_19], %29 {strides = array<i32>} : memref<128x1xf32, #tpu.memory_space<vmem>>, vector<128x1xf32>,
    return
  }
  func.func @transform_0(%arg0: i32) -> (i32, i32) {
    %c0_i32 = arith.constant 0 : i32
    %c0_i32_0 = arith.constant 0 : i32
    return %arg0, %c0_i32 : i32, i32
  }
  func.func @transform_1(%arg0: i32) -> (i32, i32) {
    %c0_i32 = arith.constant 0 : i32
    %c0_i32_0 = arith.constant 0 : i32
    %c0_i32_1 = arith.constant 0 : i32
    return %c0_i32, %c0_i32_0 : i32, i32
  }
  func.func @transform_2(%arg0: i32) -> (i32, i32) {
    %c0_i32 = arith.constant 0 : i32
    %c0_i32_0 = arith.constant 0 : i32
    %c0_i32_1 = arith.constant 0 : i32
    return %c0_i32, %c0_i32_0 : i32, i32
  }
  func.func @transform_3(%arg0: i32) -> (i32, i32) {
    %c0_i32 = arith.constant 0 : i32
    %c0_i32_0 = arith.constant 0 : i32
    %c0_i32_1 = arith.constant 0 : i32
    return %c0_i32, %c0_i32_0 : i32, i32
  }
  func.func @transform_4(%arg0: i32) -> (i32, i32) {
    %c0_i32 = arith.constant 0 : i32
    %c0_i32_0 = arith.constant 0 : i32
    %c0_i32_1 = arith.constant 0 : i32
    return %c0_i32, %c0_i32_0 : i32, i32
  }
  func.func @transform_5(%arg0: i32) -> (i32, i32) {
    %c0_i32 = arith.constant 0 : i32
    %c0_i32_0 = arith.constant 0 : i32
    %c0_i32_1 = arith.constant 0 : i32
    return %c0_i32, %c0_i32_0 : i32, i32
  }
  func.func @transform_6(%arg0: i32) -> (i32, i32) {
    %c0_i32 = arith.constant 0 : i32
    %c0_i32_0 = arith.constant 0 : i32
    %c0_i32_1 = arith.constant 0 : i32
    return %c0_i32, %c0_i32_0 : i32, i32
  }
  func.func @transform_7(%arg0: i32) -> (i32, i32) {
    %c0_i32 = arith.constant 0 : i32
    %c0_i32_0 = arith.constant 0 : i32
    return %arg0, %c0_i32 : i32, i32
  }
}

</mosaic_0001>

<llo_original>
// kernel: tpu_custom_call.1
$region0: #{tpu_custom_call.1}
  #allocation0 [shape = 'u32[]', space=smem, size = 0x4, offset = 0x4, fixed_abs, tag = 'smem constant byte address 0x4 - core index']
  #allocation1 [shape = 'u32[144,128]{1,0:T(1,128)}', space=vmem, size = 0x12000, scoped, tag = 'internal scratch']
  #allocation2 [shape = 'f32[1,1]{1,0:T(1,128)S(1)}', space=vmem, size = 0x200, scoped, tag = 'scoped memory for tpu_custom_call.1']
  %s0 = inlined_call_operand.vmem [shape: f32[8,131], index: 0, kind: input, shape index: {}]
  %s1 = inlined_call_operand.vmem [shape: bf16[131,64], index: 1, kind: input, shape index: {}]
  %s2 = inlined_call_operand.vmem [shape: f32[1,64], index: 2, kind: input, shape index: {}]
  %s3 = inlined_call_operand.vmem [shape: bf16[64,32], index: 3, kind: input, shape index: {}]
  %s4 = inlined_call_operand.vmem [shape: f32[1,32], index: 4, kind: input, shape index: {}]
  %s5 = inlined_call_operand.vmem [shape: f32[1,32], index: 5, kind: input, shape index: {}]
  %s6 = inlined_call_operand.<no memory space> [shape: f32[1,1], index: 6, kind: input, shape index: {}]
  %s7 = inlined_call_operand.hbm [shape: f32[1,128], index: 7, kind: output, shape index: {}]
  %s8 = sld [smem:[#allocation0]]
  $region38: #{tpu_custom_call.1} parent=0
    _
  %s10 = ssub.s32 1, %s8
  %s11 = scalar_select 0, %s10, %s8
  %v12 = vstv %s6
  %13 = vst [vmem:[#allocation2] sm:$0x1] %v12
  $region1: #{tpu_custom_call.1} parent=0
    #allocation3 [shape = 'u8[512]{0}', space=vmem, size = 0x400, scoped, tag = 'output window, operand 0, single buffered']
    #allocation4 [shape = 's32[1]{0}', space=sflag, size = 0x4, scoped, tag = 'scoped memory for tpu_custom_call.1']
    %14 = vsyncpa [#allocation4], 0
    // Predicated region
    $region2: #{tpu_custom_call.1} parent=1 // pred_check
      _
    $region3: #{tpu_custom_call.1} parent=1 // pred_check_branch
      %16 = sbr.rel (0) target = $region5
    $region4: #{tpu_custom_call.1} parent=1 // pred_region
      _
    $region5: #{tpu_custom_call.1} parent=1 // pred_fallthru
      _
    // Predicated region
    $region6: #{tpu_custom_call.1} parent=1 // pred_check
      _
    $region7: #{tpu_custom_call.1} parent=1 // pred_check_branch
      %18 = sbr.rel (0) target = $region9
    $region8: #{tpu_custom_call.1} parent=1 // pred_region
      _
    $region9: #{tpu_custom_call.1} parent=1 // pred_fallthru
      _
    // Predicated region
    $region10: #{tpu_custom_call.1} parent=1 // pred_check
      _
    $region11: #{tpu_custom_call.1} parent=1 // pred_check_branch
      %20 = sbr.rel (0) target = $region13
    $region12: #{tpu_custom_call.1} parent=1 // pred_region
      _
    $region13: #{tpu_custom_call.1} parent=1 // pred_fallthru
      _
    // Predicated region
    $region14: #{tpu_custom_call.1} parent=1 // pred_check
      _
    $region15: #{tpu_custom_call.1} parent=1 // pred_check_branch
      %22 = sbr.rel (0) target = $region17
    $region16: #{tpu_custom_call.1} parent=1 // pred_region
      _
    $region17: #{tpu_custom_call.1} parent=1 // pred_fallthru
      _
    // Predicated region
    $region18: #{tpu_custom_call.1} parent=1 // pred_check
      _
    $region19: #{tpu_custom_call.1} parent=1 // pred_check_branch
      %24 = sbr.rel (0) target = $region21
    $region20: #{tpu_custom_call.1} parent=1 // pred_region
      _
    $region21: #{tpu_custom_call.1} parent=1 // pred_fallthru
      _
    // Predicated region
    $region22: #{tpu_custom_call.1} parent=1 // pred_check
      _
    $region23: #{tpu_custom_call.1} parent=1 // pred_check_branch
      %26 = sbr.rel (0) target = $region25
    $region24: #{tpu_custom_call.1} parent=1 // pred_region
      _
    $region25: #{tpu_custom_call.1} parent=1 // pred_fallthru
      _
    // Predicated region
    $region26: #{tpu_custom_call.1} parent=1 // pred_check
      _
    $region27: #{tpu_custom_call.1} parent=1 // pred_check_branch
      %28 = sbr.rel (0) target = $region29
    $region28: #{tpu_custom_call.1} parent=1 // pred_region
      _
    $region29: #{tpu_custom_call.1} parent=1 // pred_fallthru
      _
    %v30 = vld [vmem:[%s0] sm:$0xff]
    %v31 = vld [vmem:[%s0 + $0x8] sm:$0xff]
    %v32 = vld [vmem:[%s0 + $0x10] sm:$0xff]
    %v33 = vld [vmem:[%s0 + $0x18] sm:$0xff]
    %v34 = vld [vmem:[%s0 + $0x20] sm:$0xff]
    %v35 = vld [vmem:[%s0 + $0x28] sm:$0xff]
    %v36 = vld [vmem:[%s0 + $0x30] sm:$0xff]
    %v37 = vld [vmem:[%s0 + $0x38] sm:$0xff]
    %v38 = vld [vmem:[%s0 + $0x40] sm:$0xff]
    %v39 = vld [vmem:[%s0 + $0x48] sm:$0xff]
    %v40 = vld [vmem:[%s0 + $0x50] sm:$0xff]
    %v41 = vld [vmem:[%s0 + $0x58] sm:$0xff]
    %v42 = vld [vmem:[%s0 + $0x60] sm:$0xff]
    %v43 = vld [vmem:[%s0 + $0x68] sm:$0xff]
    %v44 = vld [vmem:[%s0 + $0x70] sm:$0xff]
    %v45 = vld [vmem:[%s0 + $0x78] sm:$0xff]
    %v46 = vld [vmem:[%s0 + $0x80] sm:$0xff]
    %v47 = vld [vmem:[%s0 + $0x88] sm:$0xff]
    %v48 = vld [vmem:[%s0 + $0x90] sm:$0xff]
    %v49 = vld [vmem:[%s0 + $0x98] sm:$0xff]
    %v50 = vld [vmem:[%s0 + $0xa0] sm:$0xff]
    %v51 = vld [vmem:[%s0 + $0xa8] sm:$0xff]
    %v52 = vld [vmem:[%s0 + $0xb0] sm:$0xff]
    %v53 = vld [vmem:[%s0 + $0xb8] sm:$0xff]
    %v54 = vld [vmem:[%s0 + $0xc0] sm:$0xff]
    %v55 = vld [vmem:[%s0 + $0xc8] sm:$0xff]
    %v56 = vld [vmem:[%s0 + $0xd0] sm:$0xff]
    %v57 = vld [vmem:[%s0 + $0xd8] sm:$0xff]
    %v58 = vld [vmem:[%s0 + $0xe0] sm:$0xff]
    %v59 = vld [vmem:[%s0 + $0xe8] sm:$0xff]
    %v60 = vld [vmem:[%s0 + $0xf0] sm:$0xff]
    %v61 = vld [vmem:[%s0 + $0xf8] sm:$0xff]
    %v62 = vpack.c.bf16 %v32, %v30
    %v63 = vpack.c.bf16 %v33, %v31
    %v64 = vpack.c.bf16 %v36, %v34
    %v65 = vpack.c.bf16 %v37, %v35
    %v66 = vpack.c.bf16 %v40, %v38
    %v67 = vpack.c.bf16 %v41, %v39
    %v68 = vpack.c.bf16 %v44, %v42
    %v69 = vpack.c.bf16 %v45, %v43
    %v70 = vpack.c.bf16 %v48, %v46
    %v71 = vpack.c.bf16 %v49, %v47
    %v72 = vpack.c.bf16 %v52, %v50
    %v73 = vpack.c.bf16 %v53, %v51
    %v74 = vpack.c.bf16 %v56, %v54
    %v75 = vpack.c.bf16 %v57, %v55
    %v76 = vpack.c.bf16 %v60, %v58
    %v77 = vpack.c.bf16 %v61, %v59
    %v78 = vld [vmem:[%s1] sm:$0xf]
    %v79 = vld [vmem:[%s1 + $0x4] sm:$0xf]
    %v80 = vld [vmem:[%s1 + $0x8] sm:$0xf]
    %v81 = vld [vmem:[%s1 + $0xc] sm:$0xf]
    %v82 = vld [vmem:[%s1 + $0x10] sm:$0xf]
    %v83 = vld [vmem:[%s1 + $0x14] sm:$0xf]
    %v84 = vld [vmem:[%s1 + $0x18] sm:$0xf]
    %v85 = vld [vmem:[%s1 + $0x1c] sm:$0xf]
    %v86 = vld [vmem:[%s1 + $0x20] sm:$0xf]
    %v87 = vld [vmem:[%s1 + $0x24] sm:$0xf]
    %v88 = vld [vmem:[%s1 + $0x28] sm:$0xf]
    %v89 = vld [vmem:[%s1 + $0x2c] sm:$0xf]
    %v90 = vld [vmem:[%s1 + $0x30] sm:$0xf]
    %v91 = vld [vmem:[%s1 + $0x34] sm:$0xf]
    %v92 = vld [vmem:[%s1 + $0x38] sm:$0xf]
    %v93 = vld [vmem:[%s1 + $0x3c] sm:$0xf]
    %v94 = vld [vmem:[%s1 + $0x40] sm:$0x3]
    %v95 = vld [vmem:[%s2] sm:$0x1]
    %v97 = vlaneseq
    %v98 = vshrl.u32 %v97, 7
    %v99 = vsub.s32 0, %v98
    %v100 = vrot.slane %v95, %v99
    %v119 = vunpack.c.l.b16 %v78
    %v120 = vunpack.c.l.b16 %v79
    %v121 = vunpack.c.l.b16 %v80
    %v122 = vunpack.c.l.b16 %v81
    %v123 = vunpack.c.l.b16 %v82
    %v124 = vunpack.c.l.b16 %v83
    %v125 = vunpack.c.l.b16 %v84
    %v126 = vunpack.c.l.b16 %v85
    %v127 = vunpack.c.l.b16 %v86
    %v128 = vunpack.c.l.b16 %v87
    %v129 = vunpack.c.l.b16 %v88
    %v130 = vunpack.c.l.b16 %v89
    %v131 = vunpack.c.l.b16 %v90
    %v132 = vunpack.c.l.b16 %v91
    %v133 = vunpack.c.l.b16 %v92
    %v134 = vunpack.c.l.b16 %v93
    %v135 = vunpack.c.l.b16 %v94
    %v136 = vpack.c.b16 %v120, %v119
    %v137 = vpack.c.b16 %v122, %v121
    %v138 = vpack.c.b16 %v124, %v123
    %v139 = vpack.c.b16 %v126, %v125
    %v140 = vpack.c.b16 %v128, %v127
    %v141 = vpack.c.b16 %v130, %v129
    %v142 = vpack.c.b16 %v132, %v131
    %v143 = vpack.c.b16 %v134, %v133
    %v144 = vpack.c.b16 %v135, %v135
    %vm153 = vcmask 23552
    %v155 = vsel %vm153, %v63, 0
    %v158 = vsel %vm153, %v65, 0
    %v161 = vsel %vm153, %v67, 0
    %v164 = vsel %vm153, %v69, 0
    %v167 = vsel %vm153, %v71, 0
    %v170 = vsel %vm153, %v73, 0
    %v173 = vsel %vm153, %v75, 0
    %v176 = vsel %vm153, %v77, 0
    %vm178 = vcmask 1040384
    %vm179 = vcmask 1041408
    %v180 = vsel %vm178, 4294967295, 65535
    %v181 = vsel %vm179, %v180, 0
    %v183 = vand.u32 %v144, %v181
    %185 = vmatprep.subr.bf16.mxu0 0
    %186 = vmatpush1.bf16.msra.mxu0 %v136
    %187 = vmatprep.subr.bf16.mxu0 0
    %188 = vmatpush1.bf16.msra.mxu0 %v137
    %189 = vmatprep.subr.bf16.mxu0 0
    %190 = vmatpush1.bf16.msra.mxu0 %v138
    %191 = vmatprep.subr.bf16.mxu0 0
    %192 = vmatpush1.bf16.msra.mxu0 %v139
    %193 = vmatprep.subr.bf16.mxu0 0
    %194 = vmatpush1.bf16.msra.mxu0 %v140
    %195 = vmatprep.subr.bf16.mxu0 0
    %196 = vmatpush1.bf16.msra.mxu0 %v141
    %197 = vmatprep.subr.bf16.mxu0 0
    %198 = vmatpush1.bf16.msra.mxu0 %v142
    %199 = vmatprep.subr.bf16.mxu0 0
    %200 = vmatpush1.bf16.msra.mxu0 %v143
    %201 = vmatprep.subr.bf16.mxu0 0
    %202 = vmatpush1.bf16.msra.mxu0 %v183
    %203 = vmatprep.subr.bf16.mxu0 0
    %204 = vmatpush1.bf16.msra.mxu0 0
    %205 = vmatprep.subr.bf16.mxu0 0
    %206 = vmatpush1.bf16.msra.mxu0 0
    %207 = vmatprep.subr.bf16.mxu0 0
    %208 = vmatpush1.bf16.msra.mxu0 0
    %209 = vmatprep.subr.bf16.mxu0 0
    %210 = vmatpush1.bf16.msra.mxu0 0
    %211 = vmatprep.subr.bf16.mxu0 0
    %212 = vmatpush1.bf16.msra.mxu0 0
    %213 = vmatprep.subr.bf16.mxu0 0
    %214 = vmatpush1.bf16.msra.mxu0 0
    %215 = vmatprep.subr.bf16.mxu0 0
    %216 = vmatpush1.bf16.msra.mxu0 0
    %217 = vmatprep.mubr.bf16.mxu0 %v155
    %218 = vmatmul.mubr.bf16.gmra.mrb[0].mxu0 %v62
    %v219 = vpop.f32.mrb[0].mxu0
    %v220 = vadd.f32 %v100, %v219
    %v221 = vpop.f32.mrb[0].mxu0
    %v222 = vpop.f32.mrb[0].mxu0
    %v223 = vadd.f32 %v100, %v222
    %v224 = vpop.f32.mrb[0].mxu0
    %225 = vmatprep.mubr.bf16.mxu0 %v158
    %226 = vmatmul.mubr.bf16.gmra.mrb[0].mxu0 %v64
    %v227 = vpop.f32.mrb[0].mxu0
    %v228 = vadd.f32 %v100, %v227
    %v229 = vpop.f32.mrb[0].mxu0
    %v230 = vpop.f32.mrb[0].mxu0
    %v231 = vadd.f32 %v100, %v230
    %v232 = vpop.f32.mrb[0].mxu0
    %233 = vmatprep.mubr.bf16.mxu0 %v161
    %234 = vmatmul.mubr.bf16.gmra.mrb[0].mxu0 %v66
    %v235 = vpop.f32.mrb[0].mxu0
    %v236 = vadd.f32 %v100, %v235
    %v237 = vpop.f32.mrb[0].mxu0
    %v238 = vpop.f32.mrb[0].mxu0
    %v239 = vadd.f32 %v100, %v238
    %v240 = vpop.f32.mrb[0].mxu0
    %241 = vmatprep.mubr.bf16.mxu0 %v164
    %242 = vmatmul.mubr.bf16.gmra.mrb[0].mxu0 %v68
    %v243 = vpop.f32.mrb[0].mxu0
    %v244 = vadd.f32 %v100, %v243
    %v245 = vpop.f32.mrb[0].mxu0
    %v246 = vpop.f32.mrb[0].mxu0
    %v247 = vadd.f32 %v100, %v246
    %v248 = vpop.f32.mrb[0].mxu0
    %249 = vmatprep.mubr.bf16.mxu0 %v167
    %250 = vmatmul.mubr.bf16.gmra.mrb[0].mxu0 %v70
    %v251 = vpop.f32.mrb[0].mxu0
    %v252 = vadd.f32 %v100, %v251
    %v253 = vpop.f32.mrb[0].mxu0
    %v254 = vpop.f32.mrb[0].mxu0
    %v255 = vadd.f32 %v100, %v254
    %v256 = vpop.f32.mrb[0].mxu0
    %257 = vmatprep.mubr.bf16.mxu0 %v170
    %258 = vmatmul.mubr.bf16.gmra.mrb[0].mxu0 %v72
    %v259 = vpop.f32.mrb[0].mxu0
    %v260 = vadd.f32 %v100, %v259
    %v261 = vpop.f32.mrb[0].mxu0
    %v262 = vpop.f32.mrb[0].mxu0
    %v263 = vadd.f32 %v100, %v262
    %v264 = vpop.f32.mrb[0].mxu0
    %265 = vmatprep.mubr.bf16.mxu0 %v173
    %266 = vmatmul.mubr.bf16.gmra.mrb[0].mxu0 %v74
    %v267 = vpop.f32.mrb[0].mxu0
    %v268 = vadd.f32 %v100, %v267
    %v269 = vpop.f32.mrb[0].mxu0
    %v270 = vpop.f32.mrb[0].mxu0
    %v271 = vadd.f32 %v100, %v270
    %v272 = vpop.f32.mrb[0].mxu0
    %273 = vmatprep.mubr.bf16.mxu0 %v176
    %274 = vmatmul.mubr.bf16.gmra.mrb[0].mxu0 %v76
    %v275 = vpop.f32.mrb[0].mxu0
    %v276 = vadd.f32 %v100, %v275
    %v277 = vpop.f32.mrb[0].mxu0
    %v278 = vpop.f32.mrb[0].mxu0
    %v279 = vadd.f32 %v100, %v278
    %v280 = vpop.f32.mrb[0].mxu0
    %281 = vdwg.mxu0
    %v282 = vmax.f32 %v220, 0.0
    %v283 = vmax.f32 %v223, 0.0
    %v284 = vmax.f32 %v228, 0.0
    %v285 = vmax.f32 %v231, 0.0
    %v286 = vmax.f32 %v236, 0.0
    %v287 = vmax.f32 %v239, 0.0
    %v288 = vmax.f32 %v244, 0.0
    %v289 = vmax.f32 %v247, 0.0
    %v290 = vmax.f32 %v252, 0.0
    %v291 = vmax.f32 %v255, 0.0
    %v292 = vmax.f32 %v260, 0.0
    %v293 = vmax.f32 %v263, 0.0
    %v294 = vmax.f32 %v268, 0.0
    %v295 = vmax.f32 %v271, 0.0
    %v296 = vmax.f32 %v276, 0.0
    %v297 = vmax.f32 %v279, 0.0
    %v298 = vpack.c.bf16 %v283, %v282
    %v299 = vpack.c.bf16 %v285, %v284
    %v300 = vpack.c.bf16 %v287, %v286
    %v301 = vpack.c.bf16 %v289, %v288
    %v302 = vpack.c.bf16 %v291, %v290
    %v303 = vpack.c.bf16 %v293, %v292
    %v304 = vpack.c.bf16 %v295, %v294
    %v305 = vpack.c.bf16 %v297, %v296
    %v306 = vld [vmem:[%s3] sm:$0xf]
    %v307 = vld [vmem:[%s3 + $0x4] sm:$0xf]
    %v308 = vld [vmem:[%s3 + $0x8] sm:$0xf]
    %v309 = vld [vmem:[%s3 + $0xc] sm:$0xf]
    %v310 = vld [vmem:[%s3 + $0x10] sm:$0xf]
    %v311 = vld [vmem:[%s3 + $0x14] sm:$0xf]
    %v312 = vld [vmem:[%s3 + $0x18] sm:$0xf]
    %v313 = vld [vmem:[%s3 + $0x1c] sm:$0xf]
    %v314 = vld [vmem:[%s4] sm:$0x1]
    %v316 = vlaneseq
    %v317 = vshrl.u32 %v316, 7
    %v318 = vsub.s32 0, %v317
    %v319 = vrot.slane %v314, %v318
    %v329 = vunpack.c.l.b16 %v306
    %v330 = vunpack.c.l.b16 %v307
    %v331 = vunpack.c.l.b16 %v308
    %v332 = vunpack.c.l.b16 %v309
    %v333 = vunpack.c.l.b16 %v310
    %v334 = vunpack.c.l.b16 %v311
    %v335 = vunpack.c.l.b16 %v312
    %v336 = vunpack.c.l.b16 %v313
    %v337 = vpack.c.b16 %v330, %v329
    %v338 = vpack.c.b16 %v332, %v331
    %v339 = vpack.c.b16 %v334, %v333
    %v340 = vpack.c.b16 %v336, %v335
    %vm345 = vcmask 523264
    %v347 = vsel %vm345, %v298, 0
    %v350 = vsel %vm345, %v299, 0
    %v353 = vsel %vm345, %v300, 0
    %v356 = vsel %vm345, %v301, 0
    %v359 = vsel %vm345, %v302, 0
    %v362 = vsel %vm345, %v303, 0
    %v365 = vsel %vm345, %v304, 0
    %v368 = vsel %vm345, %v305, 0
    %370 = vmatprep.subr.bf16.mxu0 0
    %371 = vmatpush1.bf16.msra.mxu0 %v337
    %372 = vmatprep.subr.bf16.mxu0 0
    %373 = vmatpush1.bf16.msra.mxu0 %v338
    %374 = vmatprep.subr.bf16.mxu0 0
    %375 = vmatpush1.bf16.msra.mxu0 %v339
    %376 = vmatprep.subr.bf16.mxu0 0
    %377 = vmatpush1.bf16.msra.mxu0 %v340
    %378 = vmatprep.subr.bf16.mxu0 0
    %379 = vmatpush1.bf16.msra.mxu0 0
    %380 = vmatprep.subr.bf16.mxu0 0
    %381 = vmatpush1.bf16.msra.mxu0 0
    %382 = vmatprep.subr.bf16.mxu0 0
    %383 = vmatpush1.bf16.msra.mxu0 0
    %384 = vmatprep.subr.bf16.mxu0 0
    %385 = vmatpush1.bf16.msra.mxu0 0
    %386 = vmatprep.subr.bf16.mxu0 0
    %387 = vmatpush1.bf16.msra.mxu0 0
    %388 = vmatprep.subr.bf16.mxu0 0
    %389 = vmatpush1.bf16.msra.mxu0 0
    %390 = vmatprep.subr.bf16.mxu0 0
    %391 = vmatpush1.bf16.msra.mxu0 0
    %392 = vmatprep.subr.bf16.mxu0 0
    %393 = vmatpush1.bf16.msra.mxu0 0
    %394 = vmatprep.subr.bf16.mxu0 0
    %395 = vmatpush1.bf16.msra.mxu0 0
    %396 = vmatprep.subr.bf16.mxu0 0
    %397 = vmatpush1.bf16.msra.mxu0 0
    %398 = vmatprep.subr.bf16.mxu0 0
    %399 = vmatpush1.bf16.msra.mxu0 0
    %400 = vmatprep.subr.bf16.mxu0 0
    %401 = vmatpush1.bf16.msra.mxu0 0
    %402 = vmatprep.mubr.bf16.mxu0 0
    %403 = vmatmul.mubr.bf16.gmra.mrb[0].mxu0 %v347
    %v404 = vpop.f32.mrb[0].mxu0
    %v405 = vadd.f32 %v319, %v404
    %v406 = vpop.f32.mrb[0].mxu0
    %v407 = vpop.f32.mrb[0].mxu0
    %v408 = vadd.f32 %v319, %v407
    %v409 = vpop.f32.mrb[0].mxu0
    %410 = vmatprep.mubr.bf16.mxu0 0
    %411 = vmatmul.mubr.bf16.gmra.mrb[0].mxu0 %v350
    %v412 = vpop.f32.mrb[0].mxu0
    %v413 = vadd.f32 %v319, %v412
    %v414 = vpop.f32.mrb[0].mxu0
    %v415 = vpop.f32.mrb[0].mxu0
    %v416 = vadd.f32 %v319, %v415
    %v417 = vpop.f32.mrb[0].mxu0
    %418 = vmatprep.mubr.bf16.mxu0 0
    %419 = vmatmul.mubr.bf16.gmra.mrb[0].mxu0 %v353
    %v420 = vpop.f32.mrb[0].mxu0
    %v421 = vadd.f32 %v319, %v420
    %v422 = vpop.f32.mrb[0].mxu0
    %v423 = vpop.f32.mrb[0].mxu0
    %v424 = vadd.f32 %v319, %v423
    %v425 = vpop.f32.mrb[0].mxu0
    %426 = vmatprep.mubr.bf16.mxu0 0
    %427 = vmatmul.mubr.bf16.gmra.mrb[0].mxu0 %v356
    %v428 = vpop.f32.mrb[0].mxu0
    %v429 = vadd.f32 %v319, %v428
    %v430 = vpop.f32.mrb[0].mxu0
    %v431 = vpop.f32.mrb[0].mxu0
    %v432 = vadd.f32 %v319, %v431
    %v433 = vpop.f32.mrb[0].mxu0
    %434 = vmatprep.mubr.bf16.mxu0 0
    %435 = vmatmul.mubr.bf16.gmra.mrb[0].mxu0 %v359
    %v436 = vpop.f32.mrb[0].mxu0
    %v437 = vadd.f32 %v319, %v436
    %v438 = vpop.f32.mrb[0].mxu0
    %v439 = vpop.f32.mrb[0].mxu0
    %v440 = vadd.f32 %v319, %v439
    %v441 = vpop.f32.mrb[0].mxu0
    %442 = vmatprep.mubr.bf16.mxu0 0
    %443 = vmatmul.mubr.bf16.gmra.mrb[0].mxu0 %v362
    %v444 = vpop.f32.mrb[0].mxu0
    %v445 = vadd.f32 %v319, %v444
    %v446 = vpop.f32.mrb[0].mxu0
    %v447 = vpop.f32.mrb[0].mxu0
    %v448 = vadd.f32 %v319, %v447
    %v449 = vpop.f32.mrb[0].mxu0
    %450 = vmatprep.mubr.bf16.mxu0 0
    %451 = vmatmul.mubr.bf16.gmra.mrb[0].mxu0 %v365
    %v452 = vpop.f32.mrb[0].mxu0
    %v453 = vadd.f32 %v319, %v452
    %v454 = vpop.f32.mrb[0].mxu0
    %v455 = vpop.f32.mrb[0].mxu0
    %v456 = vadd.f32 %v319, %v455
    %v457 = vpop.f32.mrb[0].mxu0
    %458 = vmatprep.mubr.bf16.mxu0 0
    %459 = vmatmul.mubr.bf16.gmra.mrb[0].mxu0 %v368
    %v460 = vpop.f32.mrb[0].mxu0
    %v461 = vadd.f32 %v319, %v460
    %v462 = vpop.f32.mrb[0].mxu0
    %v463 = vpop.f32.mrb[0].mxu0
    %v464 = vadd.f32 %v319, %v463
    %v465 = vpop.f32.mrb[0].mxu0
    %466 = vdwg.mxu0
    %v467 = vmax.f32 %v405, 0.0
    %v468 = vmax.f32 %v408, 0.0
    %v469 = vmax.f32 %v413, 0.0
    %v470 = vmax.f32 %v416, 0.0
    %v471 = vmax.f32 %v421, 0.0
    %v472 = vmax.f32 %v424, 0.0
    %v473 = vmax.f32 %v429, 0.0
    %v474 = vmax.f32 %v432, 0.0
    %v475 = vmax.f32 %v437, 0.0
    %v476 = vmax.f32 %v440, 0.0
    %v477 = vmax.f32 %v445, 0.0
    %v478 = vmax.f32 %v448, 0.0
    %v479 = vmax.f32 %v453, 0.0
    %v480 = vmax.f32 %v456, 0.0
    %v481 = vmax.f32 %v461, 0.0
    %v482 = vmax.f32 %v464, 0.0
    %v483 = vld [vmem:[%s5] sm:$0x1]
    %v485 = vlaneseq
    %v486 = vshrl.u32 %v485, 7
    %v487 = vsub.s32 0, %v486
    %v488 = vrot.slane %v483, %v487
    %v490 = vmul.f32 %v467, %v488
    %v491 = vmul.f32 %v468, %v488
    %v492 = vmul.f32 %v469, %v488
    %v493 = vmul.f32 %v470, %v488
    %v494 = vmul.f32 %v471, %v488
    %v495 = vmul.f32 %v472, %v488
    %v496 = vmul.f32 %v473, %v488
    %v497 = vmul.f32 %v474, %v488
    %v498 = vmul.f32 %v475, %v488
    %v499 = vmul.f32 %v476, %v488
    %v500 = vmul.f32 %v477, %v488
    %v501 = vmul.f32 %v478, %v488
    %v502 = vmul.f32 %v479, %v488
    %v503 = vmul.f32 %v480, %v488
    %v504 = vmul.f32 %v481, %v488
    %v505 = vmul.f32 %v482, %v488
    %vm506 = vcmask 261120
    %v507 = vsel %vm506, %v490, 0.0
    %508 = vadd.xlane.f32.xlu0 %v507
    %v509 = vpop.xlane.xlu0 %508
    %v510 = vsel %vm506, %v491, 0.0
    %511 = vadd.xlane.f32.xlu0 %v510
    %v512 = vpop.xlane.xlu0 %511
    %v513 = vsel %vm506, %v492, 0.0
    %514 = vadd.xlane.f32.xlu0 %v513
    %v515 = vpop.xlane.xlu0 %514
    %v516 = vsel %vm506, %v493, 0.0
    %517 = vadd.xlane.f32.xlu0 %v516
    %v518 = vpop.xlane.xlu0 %517
    %v519 = vsel %vm506, %v494, 0.0
    %520 = vadd.xlane.f32.xlu0 %v519
    %v521 = vpop.xlane.xlu0 %520
    %v522 = vsel %vm506, %v495, 0.0
    %523 = vadd.xlane.f32.xlu0 %v522
    %v524 = vpop.xlane.xlu0 %523
    %v525 = vsel %vm506, %v496, 0.0
    %526 = vadd.xlane.f32.xlu0 %v525
    %v527 = vpop.xlane.xlu0 %526
    %v528 = vsel %vm506, %v497, 0.0
    %529 = vadd.xlane.f32.xlu0 %v528
    %v530 = vpop.xlane.xlu0 %529
    %v531 = vsel %vm506, %v498, 0.0
    %532 = vadd.xlane.f32.xlu0 %v531
    %v533 = vpop.xlane.xlu0 %532
    %v534 = vsel %vm506, %v499, 0.0
    %535 = vadd.xlane.f32.xlu0 %v534
    %v536 = vpop.xlane.xlu0 %535
    %v537 = vsel %vm506, %v500, 0.0
    %538 = vadd.xlane.f32.xlu0 %v537
    %v539 = vpop.xlane.xlu0 %538
    %v540 = vsel %vm506, %v501, 0.0
    %541 = vadd.xlane.f32.xlu0 %v540
    %v542 = vpop.xlane.xlu0 %541
    %v543 = vsel %vm506, %v502, 0.0
    %544 = vadd.xlane.f32.xlu0 %v543
    %v545 = vpop.xlane.xlu0 %544
    %v546 = vsel %vm506, %v503, 0.0
    %547 = vadd.xlane.f32.xlu0 %v546
    %v548 = vpop.xlane.xlu0 %547
    %v549 = vsel %vm506, %v504, 0.0
    %550 = vadd.xlane.f32.xlu0 %v549
    %v551 = vpop.xlane.xlu0 %550
    %v552 = vsel %vm506, %v505, 0.0
    %553 = vadd.xlane.f32.xlu0 %v552
    %v554 = vpop.xlane.xlu0 %553
    %v555 = vld [vmem:[#allocation2] sm:$0x1]
    %557 = vset.pattern.permute.xlu0 0
    %558 = vperm.xlu0 %557, %v555
    %v559 = vpop.permute.xlu0 %558
    %v561 = vlaneseq
    %v562 = vshrl.u32 %v561, 7
    %v563 = vsub.s32 0, %v562
    %v564 = vrot.slane %v559, %v563
    %v565 = vadd.f32 %v509, %v564
    %v566 = vadd.f32 %v512, %v564
    %v567 = vadd.f32 %v515, %v564
    %v568 = vadd.f32 %v518, %v564
    %v569 = vadd.f32 %v521, %v564
    %v570 = vadd.f32 %v524, %v564
    %v571 = vadd.f32 %v527, %v564
    %v572 = vadd.f32 %v530, %v564
    %v573 = vadd.f32 %v533, %v564
    %v574 = vadd.f32 %v536, %v564
    %v575 = vadd.f32 %v539, %v564
    %v576 = vadd.f32 %v542, %v564
    %v577 = vadd.f32 %v545, %v564
    %v578 = vadd.f32 %v548, %v564
    %v579 = vadd.f32 %v551, %v564
    %v580 = vadd.f32 %v554, %v564
    %v581 = vxor.u32 %v565, 2147483648
    %v582 = vxor.u32 %v566, 2147483648
    %v583 = vxor.u32 %v567, 2147483648
    %v584 = vxor.u32 %v568, 2147483648
    %v585 = vxor.u32 %v569, 2147483648
    %v586 = vxor.u32 %v570, 2147483648
    %v587 = vxor.u32 %v571, 2147483648
    %v588 = vxor.u32 %v572, 2147483648
    %v589 = vxor.u32 %v573, 2147483648
    %v590 = vxor.u32 %v574, 2147483648
    %v591 = vxor.u32 %v575, 2147483648
    %v592 = vxor.u32 %v576, 2147483648
    %v593 = vxor.u32 %v577, 2147483648
    %v594 = vxor.u32 %v578, 2147483648
    %v595 = vxor.u32 %v579, 2147483648
    %v596 = vxor.u32 %v580, 2147483648
    %v597 = vmul.f32 %v581, 1.442695
    %v598 = vpow.pop %v597
    %v599 = vmul.f32 %v582, 1.442695
    %v600 = vpow.pop %v599
    %v601 = vmul.f32 %v583, 1.442695
    %v602 = vpow.pop %v601
    %v603 = vmul.f32 %v584, 1.442695
    %v604 = vpow.pop %v603
    %v605 = vmul.f32 %v585, 1.442695
    %v606 = vpow.pop %v605
    %v607 = vmul.f32 %v586, 1.442695
    %v608 = vpow.pop %v607
    %v609 = vmul.f32 %v587, 1.442695
    %v610 = vpow.pop %v609
    %v611 = vmul.f32 %v588, 1.442695
    %v612 = vpow.pop %v611
    %v613 = vmul.f32 %v589, 1.442695
    %v614 = vpow.pop %v613
    %v615 = vmul.f32 %v590, 1.442695
    %v616 = vpow.pop %v615
    %v617 = vmul.f32 %v591, 1.442695
    %v618 = vpow.pop %v617
    %v619 = vmul.f32 %v592, 1.442695
    %v620 = vpow.pop %v619
    %v621 = vmul.f32 %v593, 1.442695
    %v622 = vpow.pop %v621
    %v623 = vmul.f32 %v594, 1.442695
    %v624 = vpow.pop %v623
    %v625 = vmul.f32 %v595, 1.442695
    %v626 = vpow.pop %v625
    %v627 = vmul.f32 %v596, 1.442695
    %v628 = vpow.pop %v627
    %v629 = vadd.f32 %v598, 1.0
    %v630 = vadd.f32 %v600, 1.0
    %v631 = vadd.f32 %v602, 1.0
    %v632 = vadd.f32 %v604, 1.0
    %v633 = vadd.f32 %v606, 1.0
    %v634 = vadd.f32 %v608, 1.0
    %v635 = vadd.f32 %v610, 1.0
    %v636 = vadd.f32 %v612, 1.0
    %v637 = vadd.f32 %v614, 1.0
    %v638 = vadd.f32 %v616, 1.0
    %v639 = vadd.f32 %v618, 1.0
    %v640 = vadd.f32 %v620, 1.0
    %v641 = vadd.f32 %v622, 1.0
    %v642 = vadd.f32 %v624, 1.0
    %v643 = vadd.f32 %v626, 1.0
    %v644 = vadd.f32 %v628, 1.0
    %v645 = vrcp.pop %v629
    %v646 = vmul.f32 1.0, %v645
    %v647 = vrcp.pop %v630
    %v648 = vmul.f32 1.0, %v647
    %v649 = vrcp.pop %v631
    %v650 = vmul.f32 1.0, %v649
    %v651 = vrcp.pop %v632
    %v652 = vmul.f32 1.0, %v651
    %v653 = vrcp.pop %v633
    %v654 = vmul.f32 1.0, %v653
    %v655 = vrcp.pop %v634
    %v656 = vmul.f32 1.0, %v655
    %v657 = vrcp.pop %v635
    %v658 = vmul.f32 1.0, %v657
    %v659 = vrcp.pop %v636
    %v660 = vmul.f32 1.0, %v659
    %v661 = vrcp.pop %v637
    %v662 = vmul.f32 1.0, %v661
    %v663 = vrcp.pop %v638
    %v664 = vmul.f32 1.0, %v663
    %v665 = vrcp.pop %v639
    %v666 = vmul.f32 1.0, %v665
    %v667 = vrcp.pop %v640
    %v668 = vmul.f32 1.0, %v667
    %v669 = vrcp.pop %v641
    %v670 = vmul.f32 1.0, %v669
    %v671 = vrcp.pop %v642
    %v672 = vmul.f32 1.0, %v671
    %v673 = vrcp.pop %v643
    %v674 = vmul.f32 1.0, %v673
    %v675 = vrcp.pop %v644
    %v676 = vmul.f32 1.0, %v675
    %v693 = vlaneseq
    %v694 = vand.u32 %v693, 127
    %v695 = vlaneseq
    %v696 = vshrl.u32 %v695, 7
    %v697 = vsub.s32 %v694, %v696
    %v698 = vrot.slane %v646, %v697
    %v699 = vadd.s32 %v694, 4294967288
    %v700 = vlaneseq
    %v701 = vshrl.u32 %v700, 7
    %v702 = vsub.s32 %v699, %v701
    %v703 = vrot.slane %v648, %v702
    %vm704 = vcmask 130112
    %v705 = vsel %vm704, %v703, %v698
    %v706 = vadd.s32 %v694, 4294967280
    %v707 = vlaneseq
    %v708 = vshrl.u32 %v707, 7
    %v709 = vsub.s32 %v706, %v708
    %v710 = vrot.slane %v650, %v709
    %vm711 = vcmask 195712
    %v712 = vsel %vm711, %v710, %v705
    %v713 = vadd.s32 %v694, 4294967272
    %v714 = vlaneseq
    %v715 = vshrl.u32 %v714, 7
    %v716 = vsub.s32 %v713, %v715
    %v717 = vrot.slane %v652, %v716
    %vm718 = vcmask 261312
    %v719 = vsel %vm718, %v717, %v712
    %v720 = vadd.s32 %v694, 4294967264
    %v721 = vlaneseq
    %v722 = vshrl.u32 %v721, 7
    %v723 = vsub.s32 %v720, %v722
    %v724 = vrot.slane %v654, %v723
    %vm725 = vcmask 326912
    %v726 = vsel %vm725, %v724, %v719
    %v727 = vadd.s32 %v694, 4294967256
    %v728 = vlaneseq
    %v729 = vshrl.u32 %v728, 7
    %v730 = vsub.s32 %v727, %v729
    %v731 = vrot.slane %v656, %v730
    %vm732 = vcmask 392512
    %v733 = vsel %vm732, %v731, %v726
    %v734 = vadd.s32 %v694, 4294967248
    %v735 = vlaneseq
    %v736 = vshrl.u32 %v735, 7
    %v737 = vsub.s32 %v734, %v736
    %v738 = vrot.slane %v658, %v737
    %vm739 = vcmask 458112
    %v740 = vsel %vm739, %v738, %v733
    %v741 = vadd.s32 %v694, 4294967240
    %v742 = vlaneseq
    %v743 = vshrl.u32 %v742, 7
    %v744 = vsub.s32 %v741, %v743
    %v745 = vrot.slane %v660, %v744
    %vm746 = vcmask 523712
    %v747 = vsel %vm746, %v745, %v740
    %v748 = vadd.s32 %v694, 4294967232
    %v749 = vlaneseq
    %v750 = vshrl.u32 %v749, 7
    %v751 = vsub.s32 %v748, %v750
    %v752 = vrot.slane %v662, %v751
    %vm753 = vcmask 589312
    %v754 = vsel %vm753, %v752, %v747
    %v755 = vadd.s32 %v694, 4294967224
    %v756 = vlaneseq
    %v757 = vshrl.u32 %v756, 7
    %v758 = vsub.s32 %v755, %v757
    %v759 = vrot.slane %v664, %v758
    %vm760 = vcmask 654912
    %v761 = vsel %vm760, %v759, %v754
    %v762 = vadd.s32 %v694, 4294967216
    %v763 = vlaneseq
    %v764 = vshrl.u32 %v763, 7
    %v765 = vsub.s32 %v762, %v764
    %v766 = vrot.slane %v666, %v765
    %vm767 = vcmask 720512
    %v768 = vsel %vm767, %v766, %v761
    %v769 = vadd.s32 %v694, 4294967208
    %v770 = vlaneseq
    %v771 = vshrl.u32 %v770, 7
    %v772 = vsub.s32 %v769, %v771
    %v773 = vrot.slane %v668, %v772
    %vm774 = vcmask 786112
    %v775 = vsel %vm774, %v773, %v768
    %v776 = vadd.s32 %v694, 4294967200
    %v777 = vlaneseq
    %v778 = vshrl.u32 %v777, 7
    %v779 = vsub.s32 %v776, %v778
    %v780 = vrot.slane %v670, %v779
    %vm781 = vcmask 851712
    %v782 = vsel %vm781, %v780, %v775
    %v783 = vadd.s32 %v694, 4294967192
    %v784 = vlaneseq
    %v785 = vshrl.u32 %v784, 7
    %v786 = vsub.s32 %v783, %v785
    %v787 = vrot.slane %v672, %v786
    %vm788 = vcmask 917312
    %v789 = vsel %vm788, %v787, %v782
    %v790 = vadd.s32 %v694, 4294967184
    %v791 = vlaneseq
    %v792 = vshrl.u32 %v791, 7
    %v793 = vsub.s32 %v790, %v792
    %v794 = vrot.slane %v674, %v793
    %vm795 = vcmask 982912
    %v796 = vsel %vm795, %v794, %v789
    %v797 = vadd.s32 %v694, 4294967176
    %v798 = vlaneseq
    %v799 = vshrl.u32 %v798, 7
    %v800 = vsub.s32 %v797, %v799
    %v801 = vrot.slane %v676, %v800
    %vm802 = vcmask 1048512
    %v803 = vsel %vm802, %v801, %v796
    %805 = vst [vmem:[#allocation3] sm:$0x1] %v803
    // Predicated region
    $region30: #{tpu_custom_call.1} parent=1 // pred_check
      _
    $region31: #{tpu_custom_call.1} parent=1 // pred_check_branch
      %807 = sbr.rel (0) target = $region33
    $region32: #{tpu_custom_call.1} parent=1 // pred_region
      %s809 = ssub.s32 16, 16
      %810 = vsyncadd [#allocation4], %s809
      %s812 = sshll.u32 [#allocation3], 4
      %s813 = int_to_ptr.vmem [resolvable:$true] %s812
      %815 = dma.vmem_to_hbm [thread:$0]  %s813, 16, %s7, [#allocation4]
    $region33: #{tpu_custom_call.1} parent=1 // pred_fallthru
      _
    // Predicated region
    $region34: #{tpu_custom_call.1} parent=1 // pred_check
      _
    $region35: #{tpu_custom_call.1} parent=1 // pred_check_branch
      %817 = sbr.rel (0) target = $region37
    $region36: #{tpu_custom_call.1} parent=1 // pred_region
      %818 = dma.done [#allocation4], 16
    $region37: #{tpu_custom_call.1} parent=1 // pred_fallthru
      _
    %819 = vsyncpa [#allocation4], 1

// kernel: tpu_custom_call.1
$region0: #{tpu_custom_call.1}
  #allocation0 [shape = 'u32[]', space=smem, size = 0x4, offset = 0x4, fixed_abs, tag = 'smem constant byte address 0x4 - core index']
  #allocation1 [shape = 'u32[144,128]{1,0:T(1,128)}', space=vmem, size = 0x12000, scoped, tag = 'internal scratch']
  #allocation2 [shape = 'f32[1,1]{1,0:T(1,128)S(1)}', space=vmem, size = 0x200, scoped, tag = 'scoped memory for tpu_custom_call.1']
  %s0 = inlined_call_operand.vmem [shape: f32[8,131], index: 0, kind: input, shape index: {}]
  %s1 = inlined_call_operand.vmem [shape: bf16[131,64], index: 1, kind: input, shape index: {}]
  %s2 = inlined_call_operand.vmem [shape: f32[1,64], index: 2, kind: input, shape index: {}]
  %s3 = inlined_call_operand.vmem [shape: bf16[64,32], index: 3, kind: input, shape index: {}]
  %s4 = inlined_call_operand.vmem [shape: f32[1,32], index: 4, kind: input, shape index: {}]
  %s5 = inlined_call_operand.vmem [shape: f32[1,32], index: 5, kind: input, shape index: {}]
  %s6 = inlined_call_operand.<no memory space> [shape: f32[1,1], index: 6, kind: input, shape index: {}]
  %s7 = inlined_call_operand.vmem [shape: f32[8,1], index: 7, kind: output, shape index: {}]
  %s8 = sld [smem:[#allocation0]]
  $region72: #{tpu_custom_call.1} parent=0
    _
  %s10 = ssub.s32 1, %s8
  %s11 = scalar_select 0, %s10, %s8
  %v12 = vstv %s6
  %13 = vst [vmem:[#allocation2] sm:$0x1] %v12
  $region1: #{tpu_custom_call.1} parent=0
    #allocation3 [shape = 'u8[65536]{0}', space=vmem, size = 0x10000, scoped, tag = 'output window, operand 0, single buffered']
    // Predicated region
    $region2: #{tpu_custom_call.1} parent=1 // pred_check
      _
    $region3: #{tpu_custom_call.1} parent=1 // pred_check_branch
      %15 = sbr.rel (0) target = $region5
    $region4: #{tpu_custom_call.1} parent=1 // pred_region
      _
    $region5: #{tpu_custom_call.1} parent=1 // pred_fallthru
      _
    // Predicated region
    $region6: #{tpu_custom_call.1} parent=1 // pred_check
      _
    $region7: #{tpu_custom_call.1} parent=1 // pred_check_branch
      %17 = sbr.rel (0) target = $region9
    $region8: #{tpu_custom_call.1} parent=1 // pred_region
      _
    $region9: #{tpu_custom_call.1} parent=1 // pred_fallthru
      _
    // Predicated region
    $region10: #{tpu_custom_call.1} parent=1 // pred_check
      _
    $region11: #{tpu_custom_call.1} parent=1 // pred_check_branch
      %19 = sbr.rel (0) target = $region13
    $region12: #{tpu_custom_call.1} parent=1 // pred_region
      _
    $region13: #{tpu_custom_call.1} parent=1 // pred_fallthru
      _
    // Predicated region
    $region14: #{tpu_custom_call.1} parent=1 // pred_check
      _
    $region15: #{tpu_custom_call.1} parent=1 // pred_check_branch
      %21 = sbr.rel (0) target = $region17
    $region16: #{tpu_custom_call.1} parent=1 // pred_region
      _
    $region17: #{tpu_custom_call.1} parent=1 // pred_fallthru
      _
    // Predicated region
    $region18: #{tpu_custom_call.1} parent=1 // pred_check
      _
    $region19: #{tpu_custom_call.1} parent=1 // pred_check_branch
      %23 = sbr.rel (0) target = $region21
    $region20: #{tpu_custom_call.1} parent=1 // pred_region
      _
    $region21: #{tpu_custom_call.1} parent=1 // pred_fallthru
      _
    // Predicated region
    $region22: #{tpu_custom_call.1} parent=1 // pred_check
      _
    $region23: #{tpu_custom_call.1} parent=1 // pred_check_branch
      %25 = sbr.rel (0) target = $region25
    $region24: #{tpu_custom_call.1} parent=1 // pred_region
      _
    $region25: #{tpu_custom_call.1} parent=1 // pred_fallthru
      _
    // Predicated region
    $region26: #{tpu_custom_call.1} parent=1 // pred_check
      _
    $region27: #{tpu_custom_call.1} parent=1 // pred_check_branch
      %27 = sbr.rel (0) target = $region29
    $region28: #{tpu_custom_call.1} parent=1 // pred_region
      _
    $region29: #{tpu_custom_call.1} parent=1 // pred_fallthru
      _
    %v29 = vld [vmem:[%s0] sm:$0xff]
    %v30 = vld [vmem:[%s0 + $0x8] sm:$0xff]
    %v31 = vld [vmem:[%s0 + $0x10] sm:$0xff]
    %v32 = vld [vmem:[%s0 + $0x18] sm:$0xff]
    %v33 = vld [vmem:[%s0 + $0x20] sm:$0xff]
    %v34 = vld [vmem:[%s0 + $0x28] sm:$0xff]
    %v35 = vld [vmem:[%s0 + $0x30] sm:$0xff]
    %v36 = vld [vmem:[%s0 + $0x38] sm:$0xff]
    %v37 = vld [vmem:[%s0 + $0x40] sm:$0xff]
    %v38 = vld [vmem:[%s0 + $0x48] sm:$0xff]
    %v39 = vld [vmem:[%s0 + $0x50] sm:$0xff]
    %v40 = vld [vmem:[%s0 + $0x58] sm:$0xff]
    %v41 = vld [vmem:[%s0 + $0x60] sm:$0xff]
    %v42 = vld [vmem:[%s0 + $0x68] sm:$0xff]
    %v43 = vld [vmem:[%s0 + $0x70] sm:$0xff]
    %v44 = vld [vmem:[%s0 + $0x78] sm:$0xff]
    %v45 = vld [vmem:[%s0 + $0x80] sm:$0xff]
    %v46 = vld [vmem:[%s0 + $0x88] sm:$0xff]
    %v47 = vld [vmem:[%s0 + $0x90] sm:$0xff]
    %v48 = vld [vmem:[%s0 + $0x98] sm:$0xff]
    %v49 = vld [vmem:[%s0 + $0xa0] sm:$0xff]
    %v50 = vld [vmem:[%s0 + $0xa8] sm:$0xff]
    %v51 = vld [vmem:[%s0 + $0xb0] sm:$0xff]
    %v52 = vld [vmem:[%s0 + $0xb8] sm:$0xff]
    %v53 = vld [vmem:[%s0 + $0xc0] sm:$0xff]
    %v54 = vld [vmem:[%s0 + $0xc8] sm:$0xff]
    %v55 = vld [vmem:[%s0 + $0xd0] sm:$0xff]
    %v56 = vld [vmem:[%s0 + $0xd8] sm:$0xff]
    %v57 = vld [vmem:[%s0 + $0xe0] sm:$0xff]
    %v58 = vld [vmem:[%s0 + $0xe8] sm:$0xff]
    %v59 = vld [vmem:[%s0 + $0xf0] sm:$0xff]
    %v60 = vld [vmem:[%s0 + $0xf8] sm:$0xff]
    %v61 = vpack.c.bf16 %v31, %v29
    %v62 = vpack.c.bf16 %v32, %v30
    %v63 = vpack.c.bf16 %v35, %v33
    %v64 = vpack.c.bf16 %v36, %v34
    %v65 = vpack.c.bf16 %v39, %v37
    %v66 = vpack.c.bf16 %v40, %v38
    %v67 = vpack.c.bf16 %v43, %v41
    %v68 = vpack.c.bf16 %v44, %v42
    %v69 = vpack.c.bf16 %v47, %v45
    %v70 = vpack.c.bf16 %v48, %v46
    %v71 = vpack.c.bf16 %v51, %v49
    %v72 = vpack.c.bf16 %v52, %v50
    %v73 = vpack.c.bf16 %v55, %v53
    %v74 = vpack.c.bf16 %v56, %v54
    %v75 = vpack.c.bf16 %v59, %v57
    %v76 = vpack.c.bf16 %v60, %v58
    %v77 = vld [vmem:[%s1] sm:$0xf]
    %v78 = vld [vmem:[%s1 + $0x4] sm:$0xf]
    %v79 = vld [vmem:[%s1 + $0x8] sm:$0xf]
    %v80 = vld [vmem:[%s1 + $0xc] sm:$0xf]
    %v81 = vld [vmem:[%s1 + $0x10] sm:$0xf]
    %v82 = vld [vmem:[%s1 + $0x14] sm:$0xf]
    %v83 = vld [vmem:[%s1 + $0x18] sm:$0xf]
    %v84 = vld [vmem:[%s1 + $0x1c] sm:$0xf]
    %v85 = vld [vmem:[%s1 + $0x20] sm:$0xf]
    %v86 = vld [vmem:[%s1 + $0x24] sm:$0xf]
    %v87 = vld [vmem:[%s1 + $0x28] sm:$0xf]
    %v88 = vld [vmem:[%s1 + $0x2c] sm:$0xf]
    %v89 = vld [vmem:[%s1 + $0x30] sm:$0xf]
    %v90 = vld [vmem:[%s1 + $0x34] sm:$0xf]
    %v91 = vld [vmem:[%s1 + $0x38] sm:$0xf]
    %v92 = vld [vmem:[%s1 + $0x3c] sm:$0xf]
    %v93 = vld [vmem:[%s1 + $0x40] sm:$0x3]
    %v94 = vld [vmem:[%s2] sm:$0x1]
    %v96 = vlaneseq
    %v97 = vshrl.u32 %v96, 7
    %v98 = vsub.s32 0, %v97
    %v99 = vrot.slane %v94, %v98
    %v118 = vunpack.c.l.b16 %v77
    %v119 = vunpack.c.l.b16 %v78
    %v120 = vunpack.c.l.b16 %v79
    %v121 = vunpack.c.l.b16 %v80
    %v122 = vunpack.c.l.b16 %v81
    %v123 = vunpack.c.l.b16 %v82
    %v124 = vunpack.c.l.b16 %v83
    %v125 = vunpack.c.l.b16 %v84
    %v126 = vunpack.c.l.b16 %v85
    %v127 = vunpack.c.l.b16 %v86
    %v128 = vunpack.c.l.b16 %v87
    %v129 = vunpack.c.l.b16 %v88
    %v130 = vunpack.c.l.b16 %v89
    %v131 = vunpack.c.l.b16 %v90
    %v132 = vunpack.c.l.b16 %v91
    %v133 = vunpack.c.l.b16 %v92
    %v134 = vunpack.c.l.b16 %v93
    %v135 = vpack.c.b16 %v119, %v118
    %v136 = vpack.c.b16 %v121, %v120
    %v137 = vpack.c.b16 %v123, %v122
    %v138 = vpack.c.b16 %v125, %v124
    %v139 = vpack.c.b16 %v127, %v126
    %v140 = vpack.c.b16 %v129, %v128
    %v141 = vpack.c.b16 %v131, %v130
    %v142 = vpack.c.b16 %v133, %v132
    %v143 = vpack.c.b16 %v134, %v134
    %vm152 = vcmask 23552
    %v154 = vsel %vm152, %v62, 0
    %v157 = vsel %vm152, %v64, 0
    %v160 = vsel %vm152, %v66, 0
    %v163 = vsel %vm152, %v68, 0
    %v166 = vsel %vm152, %v70, 0
    %v169 = vsel %vm152, %v72, 0
    %v172 = vsel %vm152, %v74, 0
    %v175 = vsel %vm152, %v76, 0
    %vm177 = vcmask 1040384
    %vm178 = vcmask 1041408
    %v179 = vsel %vm177, 4294967295, 65535
    %v180 = vsel %vm178, %v179, 0
    %v182 = vand.u32 %v143, %v180
    %184 = vmatprep.subr.bf16.mxu0 0
    %185 = vmatpush1.bf16.msra.mxu0 %v135
    %186 = vmatprep.subr.bf16.mxu0 0
    %187 = vmatpush1.bf16.msra.mxu0 %v136
    %188 = vmatprep.subr.bf16.mxu0 0
    %189 = vmatpush1.bf16.msra.mxu0 %v137
    %190 = vmatprep.subr.bf16.mxu0 0
    %191 = vmatpush1.bf16.msra.mxu0 %v138
    %192 = vmatprep.subr.bf16.mxu0 0
    %193 = vmatpush1.bf16.msra.mxu0 %v139
    %194 = vmatprep.subr.bf16.mxu0 0
    %195 = vmatpush1.bf16.msra.mxu0 %v140
    %196 = vmatprep.subr.bf16.mxu0 0
    %197 = vmatpush1.bf16.msra.mxu0 %v141
    %198 = vmatprep.subr.bf16.mxu0 0
    %199 = vmatpush1.bf16.msra.mxu0 %v142
    %200 = vmatprep.subr.bf16.mxu0 0
    %201 = vmatpush1.bf16.msra.mxu0 %v182
    %202 = vmatprep.subr.bf16.mxu0 0
    %203 = vmatpush1.bf16.msra.mxu0 0
    %204 = vmatprep.subr.bf16.mxu0 0
    %205 = vmatpush1.bf16.msra.mxu0 0
    %206 = vmatprep.subr.bf16.mxu0 0
    %207 = vmatpush1.bf16.msra.mxu0 0
    %208 = vmatprep.subr.bf16.mxu0 0
    %209 = vmatpush1.bf16.msra.mxu0 0
    %210 = vmatprep.subr.bf16.mxu0 0
    %211 = vmatpush1.bf16.msra.mxu0 0
    %212 = vmatprep.subr.bf16.mxu0 0
    %213 = vmatpush1.bf16.msra.mxu0 0
    %214 = vmatprep.subr.bf16.mxu0 0
    %215 = vmatpush1.bf16.msra.mxu0 0
    %216 = vmatprep.mubr.bf16.mxu0 %v154
    %217 = vmatmul.mubr.bf16.gmra.mrb[0].mxu0 %v61
    %v218 = vpop.f32.mrb[0].mxu0
    %v219 = vadd.f32 %v99, %v218
    %v220 = vpop.f32.mrb[0].mxu0
    %v221 = vpop.f32.mrb[0].mxu0
    %v222 = vadd.f32 %v99, %v221
    %v223 = vpop.f32.mrb[0].mxu0
    %224 = vmatprep.mubr.bf16.mxu0 %v157
    %225 = vmatmul.mubr.bf16.gmra.mrb[0].mxu0 %v63
    %v226 = vpop.f32.mrb[0].mxu0
    %v227 = vadd.f32 %v99, %v226
    %v228 = vpop.f32.mrb[0].mxu0
    %v229 = vpop.f32.mrb[0].mxu0
    %v230 = vadd.f32 %v99, %v229
    %v231 = vpop.f32.mrb[0].mxu0
    %232 = vmatprep.mubr.bf16.mxu0 %v160
    %233 = vmatmul.mubr.bf16.gmra.mrb[0].mxu0 %v65
    %v234 = vpop.f32.mrb[0].mxu0
    %v235 = vadd.f32 %v99, %v234
    %v236 = vpop.f32.mrb[0].mxu0
    %v237 = vpop.f32.mrb[0].mxu0
    %v238 = vadd.f32 %v99, %v237
    %v239 = vpop.f32.mrb[0].mxu0
    %240 = vmatprep.mubr.bf16.mxu0 %v163
    %241 = vmatmul.mubr.bf16.gmra.mrb[0].mxu0 %v67
    %v242 = vpop.f32.mrb[0].mxu0
    %v243 = vadd.f32 %v99, %v242
    %v244 = vpop.f32.mrb[0].mxu0
    %v245 = vpop.f32.mrb[0].mxu0
    %v246 = vadd.f32 %v99, %v245
    %v247 = vpop.f32.mrb[0].mxu0
    %248 = vmatprep.mubr.bf16.mxu0 %v166
    %249 = vmatmul.mubr.bf16.gmra.mrb[0].mxu0 %v69
    %v250 = vpop.f32.mrb[0].mxu0
    %v251 = vadd.f32 %v99, %v250
    %v252 = vpop.f32.mrb[0].mxu0
    %v253 = vpop.f32.mrb[0].mxu0
    %v254 = vadd.f32 %v99, %v253
    %v255 = vpop.f32.mrb[0].mxu0
    %256 = vmatprep.mubr.bf16.mxu0 %v169
    %257 = vmatmul.mubr.bf16.gmra.mrb[0].mxu0 %v71
    %v258 = vpop.f32.mrb[0].mxu0
    %v259 = vadd.f32 %v99, %v258
    %v260 = vpop.f32.mrb[0].mxu0
    %v261 = vpop.f32.mrb[0].mxu0
    %v262 = vadd.f32 %v99, %v261
    %v263 = vpop.f32.mrb[0].mxu0
    %264 = vmatprep.mubr.bf16.mxu0 %v172
    %265 = vmatmul.mubr.bf16.gmra.mrb[0].mxu0 %v73
    %v266 = vpop.f32.mrb[0].mxu0
    %v267 = vadd.f32 %v99, %v266
    %v268 = vpop.f32.mrb[0].mxu0
    %v269 = vpop.f32.mrb[0].mxu0
    %v270 = vadd.f32 %v99, %v269
    %v271 = vpop.f32.mrb[0].mxu0
    %272 = vmatprep.mubr.bf16.mxu0 %v175
    %273 = vmatmul.mubr.bf16.gmra.mrb[0].mxu0 %v75
    %v274 = vpop.f32.mrb[0].mxu0
    %v275 = vadd.f32 %v99, %v274
    %v276 = vpop.f32.mrb[0].mxu0
    %v277 = vpop.f32.mrb[0].mxu0
    %v278 = vadd.f32 %v99, %v277
    %v279 = vpop.f32.mrb[0].mxu0
    %280 = vdwg.mxu0
    %v281 = vmax.f32 %v219, 0.0
    %v282 = vmax.f32 %v222, 0.0
    %v283 = vmax.f32 %v227, 0.0
    %v284 = vmax.f32 %v230, 0.0
    %v285 = vmax.f32 %v235, 0.0
    %v286 = vmax.f32 %v238, 0.0
    %v287 = vmax.f32 %v243, 0.0
    %v288 = vmax.f32 %v246, 0.0
    %v289 = vmax.f32 %v251, 0.0
    %v290 = vmax.f32 %v254, 0.0
    %v291 = vmax.f32 %v259, 0.0
    %v292 = vmax.f32 %v262, 0.0
    %v293 = vmax.f32 %v267, 0.0
    %v294 = vmax.f32 %v270, 0.0
    %v295 = vmax.f32 %v275, 0.0
    %v296 = vmax.f32 %v278, 0.0
    %v297 = vpack.c.bf16 %v282, %v281
    %v298 = vpack.c.bf16 %v284, %v283
    %v299 = vpack.c.bf16 %v286, %v285
    %v300 = vpack.c.bf16 %v288, %v287
    %v301 = vpack.c.bf16 %v290, %v289
    %v302 = vpack.c.bf16 %v292, %v291
    %v303 = vpack.c.bf16 %v294, %v293
    %v304 = vpack.c.bf16 %v296, %v295
    %v305 = vld [vmem:[%s3] sm:$0xf]
    %v306 = vld [vmem:[%s3 + $0x4] sm:$0xf]
    %v307 = vld [vmem:[%s3 + $0x8] sm:$0xf]
    %v308 = vld [vmem:[%s3 + $0xc] sm:$0xf]
    %v309 = vld [vmem:[%s3 + $0x10] sm:$0xf]
    %v310 = vld [vmem:[%s3 + $0x14] sm:$0xf]
    %v311 = vld [vmem:[%s3 + $0x18] sm:$0xf]
    %v312 = vld [vmem:[%s3 + $0x1c] sm:$0xf]
    %v313 = vld [vmem:[%s4] sm:$0x1]
    %v315 = vlaneseq
    %v316 = vshrl.u32 %v315, 7
    %v317 = vsub.s32 0, %v316
    %v318 = vrot.slane %v313, %v317
    %v328 = vunpack.c.l.b16 %v305
    %v329 = vunpack.c.l.b16 %v306
    %v330 = vunpack.c.l.b16 %v307
    %v331 = vunpack.c.l.b16 %v308
    %v332 = vunpack.c.l.b16 %v309
    %v333 = vunpack.c.l.b16 %v310
    %v334 = vunpack.c.l.b16 %v311
    %v335 = vunpack.c.l.b16 %v312
    %v336 = vpack.c.b16 %v329, %v328
    %v337 = vpack.c.b16 %v331, %v330
    %v338 = vpack.c.b16 %v333, %v332
    %v339 = vpack.c.b16 %v335, %v334
    %vm344 = vcmask 523264
    %v346 = vsel %vm344, %v297, 0
    %v349 = vsel %vm344, %v298, 0
    %v352 = vsel %vm344, %v299, 0
    %v355 = vsel %vm344, %v300, 0
    %v358 = vsel %vm344, %v301, 0
    %v361 = vsel %vm344, %v302, 0
    %v364 = vsel %vm344, %v303, 0
    %v367 = vsel %vm344, %v304, 0
    %369 = vmatprep.subr.bf16.mxu0 0
    %370 = vmatpush1.bf16.msra.mxu0 %v336
    %371 = vmatprep.subr.bf16.mxu0 0
    %372 = vmatpush1.bf16.msra.mxu0 %v337
    %373 = vmatprep.subr.bf16.mxu0 0
    %374 = vmatpush1.bf16.msra.mxu0 %v338
    %375 = vmatprep.subr.bf16.mxu0 0
    %376 = vmatpush1.bf16.msra.mxu0 %v339
    %377 = vmatprep.subr.bf16.mxu0 0
    %378 = vmatpush1.bf16.msra.mxu0 0
    %379 = vmatprep.subr.bf16.mxu0 0
    %380 = vmatpush1.bf16.msra.mxu0 0
    %381 = vmatprep.subr.bf16.mxu0 0
    %382 = vmatpush1.bf16.msra.mxu0 0
    %383 = vmatprep.subr.bf16.mxu0 0
    %384 = vmatpush1.bf16.msra.mxu0 0
    %385 = vmatprep.subr.bf16.mxu0 0
    %386 = vmatpush1.bf16.msra.mxu0 0
    %387 = vmatprep.subr.bf16.mxu0 0
    %388 = vmatpush1.bf16.msra.mxu0 0
    %389 = vmatprep.subr.bf16.mxu0 0
    %390 = vmatpush1.bf16.msra.mxu0 0
    %391 = vmatprep.subr.bf16.mxu0 0
    %392 = vmatpush1.bf16.msra.mxu0 0
    %393 = vmatprep.subr.bf16.mxu0 0
    %394 = vmatpush1.bf16.msra.mxu0 0
    %395 = vmatprep.subr.bf16.mxu0 0
    %396 = vmatpush1.bf16.msra.mxu0 0
    %397 = vmatprep.subr.bf16.mxu0 0
    %398 = vmatpush1.bf16.msra.mxu0 0
    %399 = vmatprep.subr.bf16.mxu0 0
    %400 = vmatpush1.bf16.msra.mxu0 0
    %401 = vmatprep.mubr.bf16.mxu0 0
    %402 = vmatmul.mubr.bf16.gmra.mrb[0].mxu0 %v346
    %v403 = vpop.f32.mrb[0].mxu0
    %v404 = vadd.f32 %v318, %v403
    %v405 = vpop.f32.mrb[0].mxu0
    %v406 = vpop.f32.mrb[0].mxu0
    %v407 = vadd.f32 %v318, %v406
    %v408 = vpop.f32.mrb[0].mxu0
    %409 = vmatprep.mubr.bf16.mxu0 0
    %410 = vmatmul.mubr.bf16.gmra.mrb[0].mxu0 %v349
    %v411 = vpop.f32.mrb[0].mxu0
    %v412 = vadd.f32 %v318, %v411
    %v413 = vpop.f32.mrb[0].mxu0
    %v414 = vpop.f32.mrb[0].mxu0
    %v415 = vadd.f32 %v318, %v414
    %v416 = vpop.f32.mrb[0].mxu0
    %417 = vmatprep.mubr.bf16.mxu0 0
    %418 = vmatmul.mubr.bf16.gmra.mrb[0].mxu0 %v352
    %v419 = vpop.f32.mrb[0].mxu0
    %v420 = vadd.f32 %v318, %v419
    %v421 = vpop.f32.mrb[0].mxu0
    %v422 = vpop.f32.mrb[0].mxu0
    %v423 = vadd.f32 %v318, %v422
    %v424 = vpop.f32.mrb[0].mxu0
    %425 = vmatprep.mubr.bf16.mxu0 0
    %426 = vmatmul.mubr.bf16.gmra.mrb[0].mxu0 %v355
    %v427 = vpop.f32.mrb[0].mxu0
    %v428 = vadd.f32 %v318, %v427
    %v429 = vpop.f32.mrb[0].mxu0
    %v430 = vpop.f32.mrb[0].mxu0
    %v431 = vadd.f32 %v318, %v430
    %v432 = vpop.f32.mrb[0].mxu0
    %433 = vmatprep.mubr.bf16.mxu0 0
    %434 = vmatmul.mubr.bf16.gmra.mrb[0].mxu0 %v358
    %v435 = vpop.f32.mrb[0].mxu0
    %v436 = vadd.f32 %v318, %v435
    %v437 = vpop.f32.mrb[0].mxu0
    %v438 = vpop.f32.mrb[0].mxu0
    %v439 = vadd.f32 %v318, %v438
    %v440 = vpop.f32.mrb[0].mxu0
    %441 = vmatprep.mubr.bf16.mxu0 0
    %442 = vmatmul.mubr.bf16.gmra.mrb[0].mxu0 %v361
    %v443 = vpop.f32.mrb[0].mxu0
    %v444 = vadd.f32 %v318, %v443
    %v445 = vpop.f32.mrb[0].mxu0
    %v446 = vpop.f32.mrb[0].mxu0
    %v447 = vadd.f32 %v318, %v446
    %v448 = vpop.f32.mrb[0].mxu0
    %449 = vmatprep.mubr.bf16.mxu0 0
    %450 = vmatmul.mubr.bf16.gmra.mrb[0].mxu0 %v364
    %v451 = vpop.f32.mrb[0].mxu0
    %v452 = vadd.f32 %v318, %v451
    %v453 = vpop.f32.mrb[0].mxu0
    %v454 = vpop.f32.mrb[0].mxu0
    %v455 = vadd.f32 %v318, %v454
    %v456 = vpop.f32.mrb[0].mxu0
    %457 = vmatprep.mubr.bf16.mxu0 0
    %458 = vmatmul.mubr.bf16.gmra.mrb[0].mxu0 %v367
    %v459 = vpop.f32.mrb[0].mxu0
    %v460 = vadd.f32 %v318, %v459
    %v461 = vpop.f32.mrb[0].mxu0
    %v462 = vpop.f32.mrb[0].mxu0
    %v463 = vadd.f32 %v318, %v462
    %v464 = vpop.f32.mrb[0].mxu0
    %465 = vdwg.mxu0
    %v466 = vmax.f32 %v404, 0.0
    %v467 = vmax.f32 %v407, 0.0
    %v468 = vmax.f32 %v412, 0.0
    %v469 = vmax.f32 %v415, 0.0
    %v470 = vmax.f32 %v420, 0.0
    %v471 = vmax.f32 %v423, 0.0
    %v472 = vmax.f32 %v428, 0.0
    %v473 = vmax.f32 %v431, 0.0
    %v474 = vmax.f32 %v436, 0.0
    %v475 = vmax.f32 %v439, 0.0
    %v476 = vmax.f32 %v444, 0.0
    %v477 = vmax.f32 %v447, 0.0
    %v478 = vmax.f32 %v452, 0.0
    %v479 = vmax.f32 %v455, 0.0
    %v480 = vmax.f32 %v460, 0.0
    %v481 = vmax.f32 %v463, 0.0
    %v482 = vld [vmem:[%s5] sm:$0x1]
    %v484 = vlaneseq
    %v485 = vshrl.u32 %v484, 7
    %v486 = vsub.s32 0, %v485
    %v487 = vrot.slane %v482, %v486
    %v489 = vmul.f32 %v466, %v487
    %v490 = vmul.f32 %v467, %v487
    %v491 = vmul.f32 %v468, %v487
    %v492 = vmul.f32 %v469, %v487
    %v493 = vmul.f32 %v470, %v487
    %v494 = vmul.f32 %v471, %v487
    %v495 = vmul.f32 %v472, %v487
    %v496 = vmul.f32 %v473, %v487
    %v497 = vmul.f32 %v474, %v487
    %v498 = vmul.f32 %v475, %v487
    %v499 = vmul.f32 %v476, %v487
    %v500 = vmul.f32 %v477, %v487
    %v501 = vmul.f32 %v478, %v487
    %v502 = vmul.f32 %v479, %v487
    %v503 = vmul.f32 %v480, %v487
    %v504 = vmul.f32 %v481, %v487
    %vm505 = vcmask 261120
    %v506 = vsel %vm505, %v489, 0.0
    %507 = vadd.xlane.f32.xlu0 %v506
    %v508 = vpop.xlane.xlu0 %507
    %v509 = vsel %vm505, %v490, 0.0
    %510 = vadd.xlane.f32.xlu0 %v509
    %v511 = vpop.xlane.xlu0 %510
    %v512 = vsel %vm505, %v491, 0.0
    %513 = vadd.xlane.f32.xlu0 %v512
    %v514 = vpop.xlane.xlu0 %513
    %v515 = vsel %vm505, %v492, 0.0
    %516 = vadd.xlane.f32.xlu0 %v515
    %v517 = vpop.xlane.xlu0 %516
    %v518 = vsel %vm505, %v493, 0.0
    %519 = vadd.xlane.f32.xlu0 %v518
    %v520 = vpop.xlane.xlu0 %519
    %v521 = vsel %vm505, %v494, 0.0
    %522 = vadd.xlane.f32.xlu0 %v521
    %v523 = vpop.xlane.xlu0 %522
    %v524 = vsel %vm505, %v495, 0.0
    %525 = vadd.xlane.f32.xlu0 %v524
    %v526 = vpop.xlane.xlu0 %525
    %v527 = vsel %vm505, %v496, 0.0
    %528 = vadd.xlane.f32.xlu0 %v527
    %v529 = vpop.xlane.xlu0 %528
    %v530 = vsel %vm505, %v497, 0.0
    %531 = vadd.xlane.f32.xlu0 %v530
    %v532 = vpop.xlane.xlu0 %531
    %v533 = vsel %vm505, %v498, 0.0
    %534 = vadd.xlane.f32.xlu0 %v533
    %v535 = vpop.xlane.xlu0 %534
    %v536 = vsel %vm505, %v499, 0.0
    %537 = vadd.xlane.f32.xlu0 %v536
    %v538 = vpop.xlane.xlu0 %537
    %v539 = vsel %vm505, %v500, 0.0
    %540 = vadd.xlane.f32.xlu0 %v539
    %v541 = vpop.xlane.xlu0 %540
    %v542 = vsel %vm505, %v501, 0.0
    %543 = vadd.xlane.f32.xlu0 %v542
    %v544 = vpop.xlane.xlu0 %543
    %v545 = vsel %vm505, %v502, 0.0
    %546 = vadd.xlane.f32.xlu0 %v545
    %v547 = vpop.xlane.xlu0 %546
    %v548 = vsel %vm505, %v503, 0.0
    %549 = vadd.xlane.f32.xlu0 %v548
    %v550 = vpop.xlane.xlu0 %549
    %v551 = vsel %vm505, %v504, 0.0
    %552 = vadd.xlane.f32.xlu0 %v551
    %v553 = vpop.xlane.xlu0 %552
    %v554 = vld [vmem:[#allocation2] sm:$0x1]
    %v556 = vlaneseq
    %v557 = vshrl.u32 %v556, 7
    %v558 = vsub.s32 0, %v557
    %v559 = vrot.slane %v554, %v558
    %v561 = vadd.f32 %v508, %v559
    %v562 = vadd.f32 %v511, %v559
    %v563 = vadd.f32 %v514, %v559
    %v564 = vadd.f32 %v517, %v559
    %v565 = vadd.f32 %v520, %v559
    %v566 = vadd.f32 %v523, %v559
    %v567 = vadd.f32 %v526, %v559
    %v568 = vadd.f32 %v529, %v559
    %v569 = vadd.f32 %v532, %v559
    %v570 = vadd.f32 %v535, %v559
    %v571 = vadd.f32 %v538, %v559
    %v572 = vadd.f32 %v541, %v559
    %v573 = vadd.f32 %v544, %v559
    %v574 = vadd.f32 %v547, %v559
    %v575 = vadd.f32 %v550, %v559
    %v576 = vadd.f32 %v553, %v559
    %v577 = vxor.u32 %v561, 2147483648
    %v578 = vxor.u32 %v562, 2147483648
    %v579 = vxor.u32 %v563, 2147483648
    %v580 = vxor.u32 %v564, 2147483648
    %v581 = vxor.u32 %v565, 2147483648
    %v582 = vxor.u32 %v566, 2147483648
    %v583 = vxor.u32 %v567, 2147483648
    %v584 = vxor.u32 %v568, 2147483648
    %v585 = vxor.u32 %v569, 2147483648
    %v586 = vxor.u32 %v570, 2147483648
    %v587 = vxor.u32 %v571, 2147483648
    %v588 = vxor.u32 %v572, 2147483648
    %v589 = vxor.u32 %v573, 2147483648
    %v590 = vxor.u32 %v574, 2147483648
    %v591 = vxor.u32 %v575, 2147483648
    %v592 = vxor.u32 %v576, 2147483648
    %v593 = vmul.f32 %v577, 1.442695
    %v594 = vpow.pop %v593
    %v595 = vmul.f32 %v578, 1.442695
    %v596 = vpow.pop %v595
    %v597 = vmul.f32 %v579, 1.442695
    %v598 = vpow.pop %v597
    %v599 = vmul.f32 %v580, 1.442695
    %v600 = vpow.pop %v599
    %v601 = vmul.f32 %v581, 1.442695
    %v602 = vpow.pop %v601
    %v603 = vmul.f32 %v582, 1.442695
    %v604 = vpow.pop %v603
    %v605 = vmul.f32 %v583, 1.442695
    %v606 = vpow.pop %v605
    %v607 = vmul.f32 %v584, 1.442695
    %v608 = vpow.pop %v607
    %v609 = vmul.f32 %v585, 1.442695
    %v610 = vpow.pop %v609
    %v611 = vmul.f32 %v586, 1.442695
    %v612 = vpow.pop %v611
    %v613 = vmul.f32 %v587, 1.442695
    %v614 = vpow.pop %v613
    %v615 = vmul.f32 %v588, 1.442695
    %v616 = vpow.pop %v615
    %v617 = vmul.f32 %v589, 1.442695
    %v618 = vpow.pop %v617
    %v619 = vmul.f32 %v590, 1.442695
    %v620 = vpow.pop %v619
    %v621 = vmul.f32 %v591, 1.442695
    %v622 = vpow.pop %v621
    %v623 = vmul.f32 %v592, 1.442695
    %v624 = vpow.pop %v623
    %v625 = vadd.f32 %v594, 1.0
    %v626 = vadd.f32 %v596, 1.0
    %v627 = vadd.f32 %v598, 1.0
    %v628 = vadd.f32 %v600, 1.0
    %v629 = vadd.f32 %v602, 1.0
    %v630 = vadd.f32 %v604, 1.0
    %v631 = vadd.f32 %v606, 1.0
    %v632 = vadd.f32 %v608, 1.0
    %v633 = vadd.f32 %v610, 1.0
    %v634 = vadd.f32 %v612, 1.0
    %v635 = vadd.f32 %v614, 1.0
    %v636 = vadd.f32 %v616, 1.0
    %v637 = vadd.f32 %v618, 1.0
    %v638 = vadd.f32 %v620, 1.0
    %v639 = vadd.f32 %v622, 1.0
    %v640 = vadd.f32 %v624, 1.0
    %v641 = vrcp.pop %v625
    %v642 = vmul.f32 1.0, %v641
    %v643 = vrcp.pop %v626
    %v644 = vmul.f32 1.0, %v643
    %v645 = vrcp.pop %v627
    %v646 = vmul.f32 1.0, %v645
    %v647 = vrcp.pop %v628
    %v648 = vmul.f32 1.0, %v647
    %v649 = vrcp.pop %v629
    %v650 = vmul.f32 1.0, %v649
    %v651 = vrcp.pop %v630
    %v652 = vmul.f32 1.0, %v651
    %v653 = vrcp.pop %v631
    %v654 = vmul.f32 1.0, %v653
    %v655 = vrcp.pop %v632
    %v656 = vmul.f32 1.0, %v655
    %v657 = vrcp.pop %v633
    %v658 = vmul.f32 1.0, %v657
    %v659 = vrcp.pop %v634
    %v660 = vmul.f32 1.0, %v659
    %v661 = vrcp.pop %v635
    %v662 = vmul.f32 1.0, %v661
    %v663 = vrcp.pop %v636
    %v664 = vmul.f32 1.0, %v663
    %v665 = vrcp.pop %v637
    %v666 = vmul.f32 1.0, %v665
    %v667 = vrcp.pop %v638
    %v668 = vmul.f32 1.0, %v667
    %v669 = vrcp.pop %v639
    %v670 = vmul.f32 1.0, %v669
    %v671 = vrcp.pop %v640
    %v672 = vmul.f32 1.0, %v671
    %vm673 = vcmask 7168
    %674 = vst.msk [vmem:[#allocation3] sm:$0xff] %vm673, %v642
    %675 = vst.msk [vmem:[#allocation3 + $0x8] sm:$0xff] %vm673, %v644
    %676 = vst.msk [vmem:[#allocation3 + $0x10] sm:$0xff] %vm673, %v646
    %677 = vst.msk [vmem:[#allocation3 + $0x18] sm:$0xff] %vm673, %v648
    %678 = vst.msk [vmem:[#allocation3 + $0x20] sm:$0xff] %vm673, %v650
    %679 = vst.msk [vmem:[#allocation3 + $0x28] sm:$0xff] %vm673, %v652
    %680 = vst.msk [vmem:[#allocation3 + $0x30] sm:$0xff] %vm673, %v654
    %681 = vst.msk [vmem:[#allocation3 + $0x38] sm:$0xff] %vm673, %v656
    %682 = vst.msk [vmem:[#allocation3 + $0x40] sm:$0xff] %vm673, %v658
    %683 = vst.msk [vmem:[#allocation3 + $0x48] sm:$0xff] %vm673, %v660
    %684 = vst.msk [vmem:[#allocation3 + $0x50] sm:$0xff] %vm673, %v662
    %685 = vst.msk [vmem:[#allocation3 + $0x58] sm:$0xff] %vm673, %v664
    %686 = vst.msk [vmem:[#allocation3 + $0x60] sm:$0xff] %vm673, %v666
    %687 = vst.msk [vmem:[#allocation3 + $0x68] sm:$0xff] %vm673, %v668
    %688 = vst.msk [vmem:[#allocation3 + $0x70] sm:$0xff] %vm673, %v670
    %689 = vst.msk [vmem:[#allocation3 + $0x78] sm:$0xff] %vm673, %v672
    // Predicated region
    $region30: #{tpu_custom_call.1} parent=1 // pred_check
      _
    $region31: #{tpu_custom_call.1} parent=1 // pred_check_branch
      %691 = sbr.rel (0) target = $region33
    $region32: #{tpu_custom_call.1} parent=1 // pred_region
      // Predicated region
      $region34: #{tpu_custom_call.1} parent=32 // pred_check
        _
      $region35: #{tpu_custom_call.1} parent=32 // pred_check_branch
        %693 = sbr.rel (0) target = $region37
      $region36: #{tpu_custom_call.1} parent=32 // pred_region
        // Predicated region
        $region38: #{tpu_custom_call.1} parent=36 // pred_check
          _
        $region39: #{tpu_custom_call.1} parent=36 // pred_check_branch
          %695 = sbr.rel (0) target = $region41
        $region40: #{tpu_custom_call.1} parent=36 // pred_region
          // Predicated region
          $region53: #{tpu_custom_call.1} parent=40 // pred_check
            _
          $region54: #{tpu_custom_call.1} parent=40 // pred_check_branch
            %710 = sbr.rel (0) target = $region56
          $region55: #{tpu_custom_call.1} parent=40 // pred_region
            loop: start=0, step=1, limit=1
            $region57: #{tpu_custom_call.1} parent=55 // loop_pre_header
              _
            $region58: #{tpu_custom_call.1} parent=55 // loop_header
              %s712 = sphi 0, %s716
              %p713 = scmp.ge.s32.totalorder %s712, 1
              %s717 = sphi [#allocation3], [#allocation3]
              %s718 = sphi %s7, %s7
            $region59: #{tpu_custom_call.1} parent=55 // loop_header_branch
              %715 = sbr.rel (%p713) target = $region63
            $region60: #{tpu_custom_call.1} parent=55 // loop_body
              %v719 = vld [vmem:[%s717] sm:$0xff]
              %720 = vst [vmem:[%s718] sm:$0xff] %v719
            $region61: #{tpu_custom_call.1} parent=55 // loop_footer
              %s716 = sadd.s32 1, %s712
            $region62: #{tpu_custom_call.1} parent=55 // loop_footer_branch
              %711 = sbr.rel target = $region58
            $region63: #{tpu_custom_call.1} parent=55 // loop_exit
              _
          $region56: #{tpu_custom_call.1} parent=40 // pred_fallthru
            _
          // Predicated region
          $region64: #{tpu_custom_call.1} parent=40 // pred_check
            _
          $region65: #{tpu_custom_call.1} parent=40 // pred_check_branch
            %722 = sbr.rel target = $region67
          $region66: #{tpu_custom_call.1} parent=40 // pred_region
            _
          $region67: #{tpu_custom_call.1} parent=40 // pred_fallthru
            _
        $region41: #{tpu_custom_call.1} parent=36 // pred_fallthru
          _
        // Predicated region
        $region42: #{tpu_custom_call.1} parent=36 // pred_check
          _
        $region43: #{tpu_custom_call.1} parent=36 // pred_check_branch
          %697 = sbr.rel target = $region45
        $region44: #{tpu_custom_call.1} parent=36 // pred_region
          loop: start=0, step=1, limit=1
          $region46: #{tpu_custom_call.1} parent=44 // loop_pre_header
            _
          $region47: #{tpu_custom_call.1} parent=44 // loop_header
            %s700 = sphi 0, %s704
            %p701 = scmp.ge.s32.totalorder %s700, 1
            %s705 = sphi [#allocation3], [#allocation3]
            %s706 = sphi %s7, %s7
          $region48: #{tpu_custom_call.1} parent=44 // loop_header_branch
            %703 = sbr.rel (%p701) target = $region52
          $region49: #{tpu_custom_call.1} parent=44 // loop_body
            %v707 = vld [vmem:[%s705] sm:$0xff]
            %708 = vst [vmem:[%s706] sm:$0xff] %v707
          $region50: #{tpu_custom_call.1} parent=44 // loop_footer
            %s704 = sadd.s32 1, %s700
          $region51: #{tpu_custom_call.1} parent=44 // loop_footer_branch
            %699 = sbr.rel target = $region47
          $region52: #{tpu_custom_call.1} parent=44 // loop_exit
            _
        $region45: #{tpu_custom_call.1} parent=36 // pred_fallthru
          _
      $region37: #{tpu_custom_call.1} parent=32 // pred_fallthru
        _
      %723 = vnop
    $region33: #{tpu_custom_call.1} parent=1 // pred_fallthru
      _
    // Predicated region
    $region68: #{tpu_custom_call.1} parent=1 // pred_check
      _
    $region69: #{tpu_custom_call.1} parent=1 // pred_check_branch
      %725 = sbr.rel (0) target = $region71
    $region70: #{tpu_custom_call.1} parent=1 // pred_region
      _
    $region71: #{tpu_custom_call.1} parent=1 // pred_fallthru
      _

</llo_original>
